<compile_context>
chip_gen: v5e
topology: v5e:2x2
jax: 0.10.0
libtpu: 0.0.40
codegen_flags: <defaults>
</compile_context>

<pallas_src>
import functools

import jax
import jax.numpy as jnp
from jax.experimental import pallas as pl
from jax.experimental.pallas import tpu as pltpu

EPS = 1e-8
_INV_SQRT2 = 0.7071067811865476
# Exact reciprocal by default (semantic fidelity); set True for the EUP
# approximate-reciprocal fast path if the accuracy budget allows.
APPROX_RECIPROCAL = False


def _rmsnorm(x, g, eps=EPS):
    # x: (rows, D), g: (1, D).  Matches: weight * x / (||x||/sqrt(D) + eps)
    d = x.shape[-1]
    norm = jnp.sqrt(jnp.sum(x * x, axis=-1, keepdims=True)) * (1.0 / (d ** 0.5))
    return g * x * pl.reciprocal(norm + eps, approx=APPROX_RECIPROCAL)


def _gelu_exact(x):
    return 0.5 * x * (1.0 + jax.lax.erf(x * _INV_SQRT2))


def transformer_block_kernel(num_heads,
                             x_ref, qe_ref, ke_ref,
                             w_qkv_ref,   # (3*nh, D, hd)  [h]=Wq head, [nh+h]=Wk head, [2nh+h]=Wv head
                             b_qkv_ref,   # (3*nh, 1, hd)  matching biases (f32)
                             wo_h_ref,    # (nh, hd, D)    [h] = Wo[h*hd:(h+1)*hd, :]
                             vec_ref,     # (4, D)         rows: bo, b2, g1, g2 (f32)
                             w1_ref,      # (D, 4D)
                             b1_ref,      # (1, 4D)        (f32)
                             w2_ref,      # (4D, D)
                             out_ref):
    bt, f_tok, d = x_ref.shape
    nh = num_heads
    hd = d // nh
    rows = bt * f_tok
    scale = 1.0 / (hd ** 0.5)
    cd = w_qkv_ref.dtype          # MXU input dtype (f32 by default, bf16 optional)

    # Token blocks, flattened to (rows, D) so every projection is one matmul
    # with a well-filled MXU M dimension.
    x2 = x_ref[...].reshape(rows, d)                      # f32 (residual path)
    qe2 = qe_ref[...].reshape(rows, d).astype(cd)
    ke2 = ke_ref[...].reshape(rows, d).astype(cd)
    xv2 = x2.astype(cd)

    vecs = vec_ref[...]                                   # (4, D) f32
    bo, b2, g1, g2 = vecs[0:1], vecs[1:2], vecs[2:3], vecs[3:4]

    # --- XAI-guided multi-head attention ------------------------------------
    # Head selection is a leading-axis index on the repacked weights (cheap),
    # never an 8-lane sub-slice of the activations; the head merge is folded
    # into the W_o contraction as an accumulation (no lane concatenate).
    attn2 = jnp.zeros((rows, d), jnp.float32)
    for h in range(nh):                                   # static unroll (small nh)
        qh = jnp.dot(qe2, w_qkv_ref[h],
                     preferred_element_type=jnp.float32) + b_qkv_ref[h]
        kh = jnp.dot(ke2, w_qkv_ref[nh + h],
                     preferred_element_type=jnp.float32) + b_qkv_ref[nh + h]
        vh = jnp.dot(xv2, w_qkv_ref[2 * nh + h],
                     preferred_element_type=jnp.float32) + b_qkv_ref[2 * nh + h]
        # (rows, hd) -> (Bt, F, hd): attention never mixes batch elements.
        qh = qh.reshape(bt, f_tok, hd).astype(cd)
        kh = kh.reshape(bt, f_tok, hd).astype(cd)
        vh = vh.reshape(bt, f_tok, hd)

        s = jnp.einsum('bqe,bke->bqk', qh, kh,
                       preferred_element_type=jnp.float32) * scale
        s = s - jnp.max(s, axis=-1, keepdims=True)        # stable softmax (f32)
        p = jnp.exp(s)
        p = p * pl.reciprocal(jnp.sum(p, axis=-1, keepdims=True),
                              approx=APPROX_RECIPROCAL)

        o_h = jnp.einsum('bqk,bke->bqe', p.astype(cd), vh.astype(cd),
                         preferred_element_type=jnp.float32)
        attn2 = attn2 + jnp.dot(o_h.reshape(rows, hd).astype(cd), wo_h_ref[h],
                                preferred_element_type=jnp.float32)
    attn2 = attn2 + bo

    # --- residual + RMSNorm 1 ------------------------------------------------
    h1 = _rmsnorm(x2 + attn2, g1)

    # --- feed-forward: Linear(D, 4D) -> exact GELU -> Linear(4D, D) ----------
    ff = jnp.dot(h1.astype(cd), w1_ref[...],
                 preferred_element_type=jnp.float32) + b1_ref[...]
    ff = _gelu_exact(ff)
    ff = jnp.dot(ff.astype(cd), w2_ref[...],
                 preferred_element_type=jnp.float32) + b2

    # --- residual + RMSNorm 2 ------------------------------------------------
    out_ref[...] = _rmsnorm(h1 + ff, g2).reshape(bt, f_tok, d).astype(out_ref.dtype)


def _choose_batch_tile(batch, f_tok, target_rows=128):
    """Batch elements folded into one grid step.

    Aim for >= target_rows rows per step (amortizes the ~0.35us per-step
    overhead and fills the MXU M dimension), but keep >= 2 grid steps when the
    batch allows it so v7x's two TensorCores both receive work.
    """
    divisors = [dv for dv in range(1, batch + 1) if batch % dv == 0]
    want = max(1, target_rows // max(1, f_tok))
    fitting = [dv for dv in divisors if dv <= want]
    bt = max(fitting) if fitting else 1
    if batch // bt < 2 and batch > 1:
        smaller = [dv for dv in divisors if batch // dv >= 2]
        if smaller:
            bt = max(smaller)
    return bt


def xai_guided_transformer_block(x, qexpl, kexpl, fl, fu, age, gender, params,
                                 num_heads, *, compute_dtype=jnp.float32):
    """XAIGuidedTransformerBlock forward as one fused pallas_call.

    compute_dtype=jnp.bfloat16 casts MXU inputs (weights + activations) while
    keeping f32 accumulation and f32 softmax/RMSNorm/GELU (v6e/v7x option).
    """
    # TODO(synk): drofe_fn is None in the reference config, so fl/fu/age/gender
    # are accepted for API parity but unused.
    del fl, fu, age, gender
    B, F_tok, D = x.shape
    assert D % num_heads == 0, "dim must be divisible by num_heads"
    nh, hd = num_heads, D // num_heads
    H = 4 * D
    (wq, bq, wk, bk, wv, bv, wo, bo, g1, w1, b1, w2, b2, g2) = params

    # ---- wrapper-side repacking (free; outside the kernel) ------------------
    def per_head_cols(w):          # (D, D) -> (nh, D, hd); [h] == w[:, h*hd:(h+1)*hd]
        return jnp.transpose(w.reshape(D, nh, hd), (1, 0, 2))

    w_qkv = jnp.concatenate(
        [per_head_cols(wq), per_head_cols(wk), per_head_cols(wv)],
        axis=0).astype(compute_dtype)                                  # (3*nh, D, hd)
    b_qkv = jnp.concatenate(
        [bq.reshape(nh, 1, hd), bk.reshape(nh, 1, hd), bv.reshape(nh, 1, hd)],
        axis=0)                                                        # (3*nh, 1, hd) f32
    wo_h = wo.reshape(nh, hd, D).astype(compute_dtype)                 # [h] == wo[h*hd:(h+1)*hd]
    vecs = jnp.concatenate(
        [bo.reshape(1, D), b2.reshape(1, D), g1.reshape(1, D), g2.reshape(1, D)],
        axis=0)                                                        # (4, D) f32
    w1c = w1.astype(compute_dtype)
    w2c = w2.astype(compute_dtype)
    b1r = b1.reshape(1, H)

    Bt = _choose_batch_tile(B, F_tok)
    grid = (B // Bt,)

    tok_spec = pl.BlockSpec((Bt, F_tok, D), lambda b: (b, 0, 0))

    def full(arr):
        n = arr.ndim
        return pl.BlockSpec(arr.shape, lambda b: (0,) * n)

    kernel = functools.partial(transformer_block_kernel, num_heads)
    return pl.pallas_call(
        kernel,
        out_shape=jax.ShapeDtypeStruct((B, F_tok, D), x.dtype),
        grid=grid,
        in_specs=[
            tok_spec, tok_spec, tok_spec,
            full(w_qkv), full(b_qkv), full(wo_h), full(vecs),
            full(w1c), full(b1r), full(w2c),
        ],
        out_specs=tok_spec,
        compiler_params=pltpu.CompilerParams(dimension_semantics=("parallel",)),
    )(x, qexpl, kexpl, w_qkv, b_qkv, wo_h, vecs, w1c, b1r, w2c)


def make_params(key, dim):
    """Deterministic synthetic parameters (shapes match the PyTorch module).

    Linear weights are stored as (in_features, out_features): y = x @ W + b.
    """
    H = 4 * dim
    ks = jax.random.split(key, 12)
    n = lambda k, shape, s=0.05: (s * jax.random.normal(k, shape)).astype(jnp.float32)
    wq, bq = n(ks[0], (dim, dim)), n(ks[1], (1, dim))
    wk, bk = n(ks[2], (dim, dim)), n(ks[3], (1, dim))
    wv, bv = n(ks[4], (dim, dim)), n(ks[5], (1, dim))
    wo, bo = n(ks[6], (dim, dim)), n(ks[7], (1, dim))
    g1 = jnp.ones((1, dim), jnp.float32)          # RMSNorm inits to ones
    w1, b1 = n(ks[8], (dim, H)), n(ks[9], (1, H))
    w2, b2 = n(ks[10], (H, dim)), n(ks[11], (1, dim))
    g2 = jnp.ones((1, dim), jnp.float32)
    return (wq, bq, wk, bk, wv, bv, wo, bo, g1, w1, b1, w2, b2, g2)


def reference_block(x, qexpl, kexpl, params, num_heads):
    """Pure-JAX reference matching the PyTorch module semantics."""
    (wq, bq, wk, bk, wv, bv, wo, bo, g1, w1, b1, w2, b2, g2) = params
    B, F, D = x.shape
    nh, hd = num_heads, D // num_heads

    def rms(v, g):
        norm = jnp.sqrt(jnp.sum(v * v, axis=-1, keepdims=True)) * (1.0 / (D ** 0.5))
        return g.reshape(1, 1, D) * v / (norm + EPS)

    Q = qexpl @ wq + bq.reshape(1, 1, D)
    K = kexpl @ wk + bk.reshape(1, 1, D)
    V = x @ wv + bv.reshape(1, 1, D)
    Q = Q.reshape(B, F, nh, hd).transpose(0, 2, 1, 3)
    K = K.reshape(B, F, nh, hd).transpose(0, 2, 1, 3)
    V = V.reshape(B, F, nh, hd).transpose(0, 2, 1, 3)
    S = jnp.einsum('bhqe,bhke->bhqk', Q, K) / (hd ** 0.5)
    P = jax.nn.softmax(S, axis=-1)
    O = jnp.einsum('bhqk,bhke->bhqe', P, V)
    O = O.transpose(0, 2, 1, 3).reshape(B, F, D)
    attn = O @ wo + bo.reshape(1, 1, D)
    h1 = rms(x + attn, g1)
    ff = h1 @ w1 + b1.reshape(1, 1, 4 * D)
    ff = jax.nn.gelu(ff, approximate=False)
    ff = ff @ w2 + b2.reshape(1, 1, D)
    return rms(h1 + ff, g2)


if __name__ == "__main__":
    B, F_tok, D, num_heads = 2, 8, 32, 4

    key = jax.random.PRNGKey(0)
    k_x, k_q, k_k, k_p, k_a = jax.random.split(key, 5)
    x     = jax.random.normal(k_x, (B, F_tok, D), jnp.float32)
    qexpl = jax.random.normal(k_q, (B, F_tok, D), jnp.float32)
    kexpl = jax.random.normal(k_k, (B, F_tok, D), jnp.float32)
    # Unused auxiliary inputs (drofe_fn is None in the default module config).
    fl = jnp.full((B,), 1.0, jnp.float32)
    fu = jnp.full((B,), 4.0, jnp.float32)
    age = jax.random.uniform(k_a, (B,), jnp.float32, 20.0, 60.0)
    gender = jnp.zeros((B,), jnp.float32)

    params = make_params(k_p, D)

    out = xai_guided_transformer_block(x, qexpl, kexpl, fl, fu, age, gender,
                                       params, num_heads)
    out = jax.block_until_ready(out)
    assert out.shape == (B, F_tok, D)

    # Correctness check against a pure-JAX reference of the module.
    with jax.default_matmul_precision("float32"):
        ref = reference_block(x, qexpl, kexpl, params, num_heads)
    ref = jax.block_until_ready(ref)
    max_diff = float(jnp.max(jnp.abs(out - ref)))
    assert max_diff < 1e-2, f"kernel vs reference mismatch: {max_diff}"

    print("KERNEL_OK")
</pallas_src>

<mosaic_0001>
module attributes {stable_mosaic.version = 11 : i64} {
  func.func @transformer_block_kernel(%arg0: i32, %arg1: memref<1x8x32xf32, #tpu.memory_space<vmem>>, %arg2: memref<1x8x32xf32, #tpu.memory_space<vmem>>, %arg3: memref<1x8x32xf32, #tpu.memory_space<vmem>>, %arg4: memref<12x32x8xf32, #tpu.memory_space<vmem>>, %arg5: memref<12x1x8xf32, #tpu.memory_space<vmem>>, %arg6: memref<4x8x32xf32, #tpu.memory_space<vmem>>, %arg7: memref<4x32xf32, #tpu.memory_space<vmem>>, %arg8: memref<32x128xf32, #tpu.memory_space<vmem>>, %arg9: memref<1x128xf32, #tpu.memory_space<vmem>>, %arg10: memref<128x32xf32, #tpu.memory_space<vmem>>, %arg11: memref<1x8x32xf32, #tpu.memory_space<vmem>>) attributes {dimension_semantics = [#tpu.dimension_semantics<parallel>], iteration_bounds = array<i64: 2>, scalar_prefetch = 0 : i64, scratch_operands = 0 : i64, tpu.core_type = #tpu.core_type<tc>, window_params = [{transform_indices = @transform_0, window_bounds = array<i64: 1, 8, 32>}, {transform_indices = @transform_1, window_bounds = array<i64: 1, 8, 32>}, {transform_indices = @transform_2, window_bounds = array<i64: 1, 8, 32>}, {pipeline_mode = #tpu.pipeline_mode<synchronous>, transform_indices = @transform_3, window_bounds = array<i64: 12, 32, 8>}, {pipeline_mode = #tpu.pipeline_mode<synchronous>, transform_indices = @transform_4, window_bounds = array<i64: 12, 1, 8>}, {pipeline_mode = #tpu.pipeline_mode<synchronous>, transform_indices = @transform_5, window_bounds = array<i64: 4, 8, 32>}, {pipeline_mode = #tpu.pipeline_mode<synchronous>, transform_indices = @transform_6, window_bounds = array<i64: 4, 32>}, {pipeline_mode = #tpu.pipeline_mode<synchronous>, transform_indices = @transform_7, window_bounds = array<i64: 32, 128>}, {pipeline_mode = #tpu.pipeline_mode<synchronous>, transform_indices = @transform_8, window_bounds = array<i64: 1, 128>}, {pipeline_mode = #tpu.pipeline_mode<synchronous>, transform_indices = @transform_9, window_bounds = array<i64: 128, 32>}, {transform_indices = @transform_10, window_bounds = array<i64: 1, 8, 32>}]} {
    %c0 = arith.constant 0 : index
    %c0_0 = arith.constant 0 : index
    %c0_1 = arith.constant 0 : index
    %0 = vector.load %arg1[%c0, %c0_0, %c0_1] : memref<1x8x32xf32, #tpu.memory_space<vmem>>, vector<1x8x32xf32>
    %1 = vector.shape_cast %0 : vector<1x8x32xf32> to vector<8x32xf32>
    %c0_2 = arith.constant 0 : index
    %c0_3 = arith.constant 0 : index
    %c0_4 = arith.constant 0 : index
    %2 = vector.load %arg2[%c0_2, %c0_3, %c0_4] : memref<1x8x32xf32, #tpu.memory_space<vmem>>, vector<1x8x32xf32>
    %3 = vector.shape_cast %2 : vector<1x8x32xf32> to vector<8x32xf32>
    %c0_5 = arith.constant 0 : index
    %c0_6 = arith.constant 0 : index
    %c0_7 = arith.constant 0 : index
    %4 = vector.load %arg3[%c0_5, %c0_6, %c0_7] : memref<1x8x32xf32, #tpu.memory_space<vmem>>, vector<1x8x32xf32>
    %5 = vector.shape_cast %4 : vector<1x8x32xf32> to vector<8x32xf32>
    %c0_8 = arith.constant 0 : index
    %c0_9 = arith.constant 0 : index
    %6 = vector.load %arg7[%c0_8, %c0_9] : memref<4x32xf32, #tpu.memory_space<vmem>>, vector<4x32xf32>
    %7 = vector.extract_strided_slice %6 {offsets = [0, 0], sizes = [1, 32], strides = [1, 1]} : vector<4x32xf32> to vector<1x32xf32>
    %8 = vector.extract_strided_slice %6 {offsets = [1, 0], sizes = [1, 32], strides = [1, 1]} : vector<4x32xf32> to vector<1x32xf32>
    %9 = vector.extract_strided_slice %6 {offsets = [2, 0], sizes = [1, 32], strides = [1, 1]} : vector<4x32xf32> to vector<1x32xf32>
    %10 = vector.extract_strided_slice %6 {offsets = [3, 0], sizes = [1, 32], strides = [1, 1]} : vector<4x32xf32> to vector<1x32xf32>
    %cst = arith.constant 0.000000e+00 : f32
    %11 = vector.broadcast %cst : f32 to vector<8x32xf32>
    %c0_10 = arith.constant 0 : index
    %c0_11 = arith.constant 0 : index
    %c0_12 = arith.constant 0 : index
    %12 = vector.load %arg4[%c0_10, %c0_11, %c0_12] : memref<12x32x8xf32, #tpu.memory_space<vmem>>, vector<1x32x8xf32>
    %13 = vector.shape_cast %12 : vector<1x32x8xf32> to vector<32x8xf32>
    %cst_13 = arith.constant dense<0.000000e+00> : vector<8x8xf32>
    %14 = tpu.matmul %3, %13, %cst_13 {dimension_numbers = #tpu.dot_dimension_numbers<[1], [0], [0], [1], [0, 0, 1, 1], [], []>} : vector<8x32xf32>, vector<32x8xf32>, vector<8x8xf32> -> vector<8x8xf32>
    %c0_14 = arith.constant 0 : index
    %c0_15 = arith.constant 0 : index
    %c0_16 = arith.constant 0 : index
    %15 = vector.load %arg5[%c0_14, %c0_15, %c0_16] : memref<12x1x8xf32, #tpu.memory_space<vmem>>, vector<1x1x8xf32>
    %16 = vector.shape_cast %15 : vector<1x1x8xf32> to vector<1x8xf32>
    %17 = vector.broadcast %16 : vector<1x8xf32> to vector<8x8xf32>
    %18 = arith.addf %14, %17 : vector<8x8xf32>
    %c4 = arith.constant 4 : index
    %c0_17 = arith.constant 0 : index
    %c0_18 = arith.constant 0 : index
    %19 = vector.load %arg4[%c4, %c0_17, %c0_18] : memref<12x32x8xf32, #tpu.memory_space<vmem>>, vector<1x32x8xf32>
    %20 = vector.shape_cast %19 : vector<1x32x8xf32> to vector<32x8xf32>
    %cst_19 = arith.constant dense<0.000000e+00> : vector<8x8xf32>
    %21 = tpu.matmul %5, %20, %cst_19 {dimension_numbers = #tpu.dot_dimension_numbers<[1], [0], [0], [1], [0, 0, 1, 1], [], []>} : vector<8x32xf32>, vector<32x8xf32>, vector<8x8xf32> -> vector<8x8xf32>
    %c4_20 = arith.constant 4 : index
    %c0_21 = arith.constant 0 : index
    %c0_22 = arith.constant 0 : index
    %22 = vector.load %arg5[%c4_20, %c0_21, %c0_22] : memref<12x1x8xf32, #tpu.memory_space<vmem>>, vector<1x1x8xf32>
    %23 = vector.shape_cast %22 : vector<1x1x8xf32> to vector<1x8xf32>
    %24 = vector.broadcast %23 : vector<1x8xf32> to vector<8x8xf32>
    %25 = arith.addf %21, %24 : vector<8x8xf32>
    %c8 = arith.constant 8 : index
    %c0_23 = arith.constant 0 : index
    %c0_24 = arith.constant 0 : index
    %26 = vector.load %arg4[%c8, %c0_23, %c0_24] : memref<12x32x8xf32, #tpu.memory_space<vmem>>, vector<1x32x8xf32>
    %27 = vector.shape_cast %26 : vector<1x32x8xf32> to vector<32x8xf32>
    %cst_25 = arith.constant dense<0.000000e+00> : vector<8x8xf32>
    %28 = tpu.matmul %1, %27, %cst_25 {dimension_numbers = #tpu.dot_dimension_numbers<[1], [0], [0], [1], [0, 0, 1, 1], [], []>} : vector<8x32xf32>, vector<32x8xf32>, vector<8x8xf32> -> vector<8x8xf32>
    %c8_26 = arith.constant 8 : index
    %c0_27 = arith.constant 0 : index
    %c0_28 = arith.constant 0 : index
    %29 = vector.load %arg5[%c8_26, %c0_27, %c0_28] : memref<12x1x8xf32, #tpu.memory_space<vmem>>, vector<1x1x8xf32>
    %30 = vector.shape_cast %29 : vector<1x1x8xf32> to vector<1x8xf32>
    %31 = vector.broadcast %30 : vector<1x8xf32> to vector<8x8xf32>
    %32 = arith.addf %28, %31 : vector<8x8xf32>
    %33 = vector.shape_cast %18 : vector<8x8xf32> to vector<1x8x8xf32>
    %34 = vector.shape_cast %25 : vector<8x8xf32> to vector<1x8x8xf32>
    %35 = vector.shape_cast %32 : vector<8x8xf32> to vector<1x8x8xf32>
    "tpu.trace_start"() <{level = 10 : i32, message = "bqe,bke->bqk"}> : () -> ()
    %cst_29 = arith.constant dense<0.000000e+00> : vector<1x8x8xf32>
    %36 = tpu.matmul %33, %34, %cst_29 {dimension_numbers = #tpu.dot_dimension_numbers<[2], [2], [1], [1], [0, 0, 0, 1, 1, 1], [0], [0]>} : vector<1x8x8xf32>, vector<1x8x8xf32>, vector<1x8x8xf32> -> vector<1x8x8xf32>
    "tpu.trace_stop"() : () -> ()
    %cst_30 = arith.constant 0.353553385 : f32
    %37 = vector.broadcast %cst_30 : f32 to vector<1x8x8xf32>
    %38 = arith.mulf %36, %37 : vector<1x8x8xf32>
    %cst_31 = arith.constant dense<0xFF800000> : vector<1x8xf32>
    %39 = vector.multi_reduction <maximumf>, %38, %cst_31 [2] : vector<1x8x8xf32> to vector<1x8xf32>
    %40 = vector.shape_cast %39 : vector<1x8xf32> to vector<1x8x1xf32>
    %41 = vector.broadcast %40 : vector<1x8x1xf32> to vector<1x8x8xf32>
    %42 = arith.subf %38, %41 : vector<1x8x8xf32>
    %43 = math.exp %42 : vector<1x8x8xf32>
    %cst_32 = arith.constant dense<0.000000e+00> : vector<1x8xf32>
    %44 = vector.multi_reduction <add>, %43, %cst_32 [2] : vector<1x8x8xf32> to vector<1x8xf32>
    %45 = vector.shape_cast %44 : vector<1x8xf32> to vector<1x8x1xf32>
    %46 = tpu.reciprocal %45 : vector<1x8x1xf32> -> vector<1x8x1xf32>
    %47 = vector.broadcast %46 : vector<1x8x1xf32> to vector<1x8x8xf32>
    %48 = arith.mulf %43, %47 : vector<1x8x8xf32>
    "tpu.trace_start"() <{level = 10 : i32, message = "bqk,bke->bqe"}> : () -> ()
    %cst_33 = arith.constant dense<0.000000e+00> : vector<1x8x8xf32>
    %49 = tpu.matmul %48, %35, %cst_33 {dimension_numbers = #tpu.dot_dimension_numbers<[2], [1], [1], [2], [0, 0, 0, 1, 1, 2], [0], [0]>} : vector<1x8x8xf32>, vector<1x8x8xf32>, vector<1x8x8xf32> -> vector<1x8x8xf32>
    "tpu.trace_stop"() : () -> ()
    %50 = vector.shape_cast %49 : vector<1x8x8xf32> to vector<8x8xf32>
    %c0_34 = arith.constant 0 : index
    %c0_35 = arith.constant 0 : index
    %c0_36 = arith.constant 0 : index
    %51 = vector.load %arg6[%c0_34, %c0_35, %c0_36] : memref<4x8x32xf32, #tpu.memory_space<vmem>>, vector<1x8x32xf32>
    %52 = vector.shape_cast %51 : vector<1x8x32xf32> to vector<8x32xf32>
    %cst_37 = arith.constant dense<0.000000e+00> : vector<8x32xf32>
    %53 = tpu.matmul %50, %52, %cst_37 {dimension_numbers = #tpu.dot_dimension_numbers<[1], [0], [0], [1], [0, 0, 1, 1], [], []>} : vector<8x8xf32>, vector<8x32xf32>, vector<8x32xf32> -> vector<8x32xf32>
    %54 = arith.addf %11, %53 : vector<8x32xf32>
    %c1 = arith.constant 1 : index
    %c0_38 = arith.constant 0 : index
    %c0_39 = arith.constant 0 : index
    %55 = vector.load %arg4[%c1, %c0_38, %c0_39] : memref<12x32x8xf32, #tpu.memory_space<vmem>>, vector<1x32x8xf32>
    %56 = vector.shape_cast %55 : vector<1x32x8xf32> to vector<32x8xf32>
    %cst_40 = arith.constant dense<0.000000e+00> : vector<8x8xf32>
    %57 = tpu.matmul %3, %56, %cst_40 {dimension_numbers = #tpu.dot_dimension_numbers<[1], [0], [0], [1], [0, 0, 1, 1], [], []>} : vector<8x32xf32>, vector<32x8xf32>, vector<8x8xf32> -> vector<8x8xf32>
    %c1_41 = arith.constant 1 : index
    %c0_42 = arith.constant 0 : index
    %c0_43 = arith.constant 0 : index
    %58 = vector.load %arg5[%c1_41, %c0_42, %c0_43] : memref<12x1x8xf32, #tpu.memory_space<vmem>>, vector<1x1x8xf32>
    %59 = vector.shape_cast %58 : vector<1x1x8xf32> to vector<1x8xf32>
    %60 = vector.broadcast %59 : vector<1x8xf32> to vector<8x8xf32>
    %61 = arith.addf %57, %60 : vector<8x8xf32>
    %c5 = arith.constant 5 : index
    %c0_44 = arith.constant 0 : index
    %c0_45 = arith.constant 0 : index
    %62 = vector.load %arg4[%c5, %c0_44, %c0_45] : memref<12x32x8xf32, #tpu.memory_space<vmem>>, vector<1x32x8xf32>
    %63 = vector.shape_cast %62 : vector<1x32x8xf32> to vector<32x8xf32>
    %cst_46 = arith.constant dense<0.000000e+00> : vector<8x8xf32>
    %64 = tpu.matmul %5, %63, %cst_46 {dimension_numbers = #tpu.dot_dimension_numbers<[1], [0], [0], [1], [0, 0, 1, 1], [], []>} : vector<8x32xf32>, vector<32x8xf32>, vector<8x8xf32> -> vector<8x8xf32>
    %c5_47 = arith.constant 5 : index
    %c0_48 = arith.constant 0 : index
    %c0_49 = arith.constant 0 : index
    %65 = vector.load %arg5[%c5_47, %c0_48, %c0_49] : memref<12x1x8xf32, #tpu.memory_space<vmem>>, vector<1x1x8xf32>
    %66 = vector.shape_cast %65 : vector<1x1x8xf32> to vector<1x8xf32>
    %67 = vector.broadcast %66 : vector<1x8xf32> to vector<8x8xf32>
    %68 = arith.addf %64, %67 : vector<8x8xf32>
    %c9 = arith.constant 9 : index
    %c0_50 = arith.constant 0 : index
    %c0_51 = arith.constant 0 : index
    %69 = vector.load %arg4[%c9, %c0_50, %c0_51] : memref<12x32x8xf32, #tpu.memory_space<vmem>>, vector<1x32x8xf32>
    %70 = vector.shape_cast %69 : vector<1x32x8xf32> to vector<32x8xf32>
    %cst_52 = arith.constant dense<0.000000e+00> : vector<8x8xf32>
    %71 = tpu.matmul %1, %70, %cst_52 {dimension_numbers = #tpu.dot_dimension_numbers<[1], [0], [0], [1], [0, 0, 1, 1], [], []>} : vector<8x32xf32>, vector<32x8xf32>, vector<8x8xf32> -> vector<8x8xf32>
    %c9_53 = arith.constant 9 : index
    %c0_54 = arith.constant 0 : index
    %c0_55 = arith.constant 0 : index
    %72 = vector.load %arg5[%c9_53, %c0_54, %c0_55] : memref<12x1x8xf32, #tpu.memory_space<vmem>>, vector<1x1x8xf32>
    %73 = vector.shape_cast %72 : vector<1x1x8xf32> to vector<1x8xf32>
    %74 = vector.broadcast %73 : vector<1x8xf32> to vector<8x8xf32>
    %75 = arith.addf %71, %74 : vector<8x8xf32>
    %76 = vector.shape_cast %61 : vector<8x8xf32> to vector<1x8x8xf32>
    %77 = vector.shape_cast %68 : vector<8x8xf32> to vector<1x8x8xf32>
    %78 = vector.shape_cast %75 : vector<8x8xf32> to vector<1x8x8xf32>
    "tpu.trace_start"() <{level = 10 : i32, message = "bqe,bke->bqk"}> : () -> ()
    %cst_56 = arith.constant dense<0.000000e+00> : vector<1x8x8xf32>
    %79 = tpu.matmul %76, %77, %cst_56 {dimension_numbers = #tpu.dot_dimension_numbers<[2], [2], [1], [1], [0, 0, 0, 1, 1, 1], [0], [0]>} : vector<1x8x8xf32>, vector<1x8x8xf32>, vector<1x8x8xf32> -> vector<1x8x8xf32>
    "tpu.trace_stop"() : () -> ()
    %cst_57 = arith.constant 0.353553385 : f32
    %80 = vector.broadcast %cst_57 : f32 to vector<1x8x8xf32>
    %81 = arith.mulf %79, %80 : vector<1x8x8xf32>
    %cst_58 = arith.constant dense<0xFF800000> : vector<1x8xf32>
    %82 = vector.multi_reduction <maximumf>, %81, %cst_58 [2] : vector<1x8x8xf32> to vector<1x8xf32>
    %83 = vector.shape_cast %82 : vector<1x8xf32> to vector<1x8x1xf32>
    %84 = vector.broadcast %83 : vector<1x8x1xf32> to vector<1x8x8xf32>
    %85 = arith.subf %81, %84 : vector<1x8x8xf32>
    %86 = math.exp %85 : vector<1x8x8xf32>
    %cst_59 = arith.constant dense<0.000000e+00> : vector<1x8xf32>
    %87 = vector.multi_reduction <add>, %86, %cst_59 [2] : vector<1x8x8xf32> to vector<1x8xf32>
    %88 = vector.shape_cast %87 : vector<1x8xf32> to vector<1x8x1xf32>
    %89 = tpu.reciprocal %88 : vector<1x8x1xf32> -> vector<1x8x1xf32>
    %90 = vector.broadcast %89 : vector<1x8x1xf32> to vector<1x8x8xf32>
    %91 = arith.mulf %86, %90 : vector<1x8x8xf32>
    "tpu.trace_start"() <{level = 10 : i32, message = "bqk,bke->bqe"}> : () -> ()
    %cst_60 = arith.constant dense<0.000000e+00> : vector<1x8x8xf32>
    %92 = tpu.matmul %91, %78, %cst_60 {dimension_numbers = #tpu.dot_dimension_numbers<[2], [1], [1], [2], [0, 0, 0, 1, 1, 2], [0], [0]>} : vector<1x8x8xf32>, vector<1x8x8xf32>, vector<1x8x8xf32> -> vector<1x8x8xf32>
    "tpu.trace_stop"() : () -> ()
    %93 = vector.shape_cast %92 : vector<1x8x8xf32> to vector<8x8xf32>
    %c1_61 = arith.constant 1 : index
    %c0_62 = arith.constant 0 : index
    %c0_63 = arith.constant 0 : index
    %94 = vector.load %arg6[%c1_61, %c0_62, %c0_63] : memref<4x8x32xf32, #tpu.memory_space<vmem>>, vector<1x8x32xf32>
    %95 = vector.shape_cast %94 : vector<1x8x32xf32> to vector<8x32xf32>
    %cst_64 = arith.constant dense<0.000000e+00> : vector<8x32xf32>
    %96 = tpu.matmul %93, %95, %cst_64 {dimension_numbers = #tpu.dot_dimension_numbers<[1], [0], [0], [1], [0, 0, 1, 1], [], []>} : vector<8x8xf32>, vector<8x32xf32>, vector<8x32xf32> -> vector<8x32xf32>
    %97 = arith.addf %54, %96 : vector<8x32xf32>
    %c2 = arith.constant 2 : index
    %c0_65 = arith.constant 0 : index
    %c0_66 = arith.constant 0 : index
    %98 = vector.load %arg4[%c2, %c0_65, %c0_66] : memref<12x32x8xf32, #tpu.memory_space<vmem>>, vector<1x32x8xf32>
    %99 = vector.shape_cast %98 : vector<1x32x8xf32> to vector<32x8xf32>
    %cst_67 = arith.constant dense<0.000000e+00> : vector<8x8xf32>
    %100 = tpu.matmul %3, %99, %cst_67 {dimension_numbers = #tpu.dot_dimension_numbers<[1], [0], [0], [1], [0, 0, 1, 1], [], []>} : vector<8x32xf32>, vector<32x8xf32>, vector<8x8xf32> -> vector<8x8xf32>
    %c2_68 = arith.constant 2 : index
    %c0_69 = arith.constant 0 : index
    %c0_70 = arith.constant 0 : index
    %101 = vector.load %arg5[%c2_68, %c0_69, %c0_70] : memref<12x1x8xf32, #tpu.memory_space<vmem>>, vector<1x1x8xf32>
    %102 = vector.shape_cast %101 : vector<1x1x8xf32> to vector<1x8xf32>
    %103 = vector.broadcast %102 : vector<1x8xf32> to vector<8x8xf32>
    %104 = arith.addf %100, %103 : vector<8x8xf32>
    %c6 = arith.constant 6 : index
    %c0_71 = arith.constant 0 : index
    %c0_72 = arith.constant 0 : index
    %105 = vector.load %arg4[%c6, %c0_71, %c0_72] : memref<12x32x8xf32, #tpu.memory_space<vmem>>, vector<1x32x8xf32>
    %106 = vector.shape_cast %105 : vector<1x32x8xf32> to vector<32x8xf32>
    %cst_73 = arith.constant dense<0.000000e+00> : vector<8x8xf32>
    %107 = tpu.matmul %5, %106, %cst_73 {dimension_numbers = #tpu.dot_dimension_numbers<[1], [0], [0], [1], [0, 0, 1, 1], [], []>} : vector<8x32xf32>, vector<32x8xf32>, vector<8x8xf32> -> vector<8x8xf32>
    %c6_74 = arith.constant 6 : index
    %c0_75 = arith.constant 0 : index
    %c0_76 = arith.constant 0 : index
    %108 = vector.load %arg5[%c6_74, %c0_75, %c0_76] : memref<12x1x8xf32, #tpu.memory_space<vmem>>, vector<1x1x8xf32>
    %109 = vector.shape_cast %108 : vector<1x1x8xf32> to vector<1x8xf32>
    %110 = vector.broadcast %109 : vector<1x8xf32> to vector<8x8xf32>
    %111 = arith.addf %107, %110 : vector<8x8xf32>
    %c10 = arith.constant 10 : index
    %c0_77 = arith.constant 0 : index
    %c0_78 = arith.constant 0 : index
    %112 = vector.load %arg4[%c10, %c0_77, %c0_78] : memref<12x32x8xf32, #tpu.memory_space<vmem>>, vector<1x32x8xf32>
    %113 = vector.shape_cast %112 : vector<1x32x8xf32> to vector<32x8xf32>
    %cst_79 = arith.constant dense<0.000000e+00> : vector<8x8xf32>
    %114 = tpu.matmul %1, %113, %cst_79 {dimension_numbers = #tpu.dot_dimension_numbers<[1], [0], [0], [1], [0, 0, 1, 1], [], []>} : vector<8x32xf32>, vector<32x8xf32>, vector<8x8xf32> -> vector<8x8xf32>
    %c10_80 = arith.constant 10 : index
    %c0_81 = arith.constant 0 : index
    %c0_82 = arith.constant 0 : index
    %115 = vector.load %arg5[%c10_80, %c0_81, %c0_82] : memref<12x1x8xf32, #tpu.memory_space<vmem>>, vector<1x1x8xf32>
    %116 = vector.shape_cast %115 : vector<1x1x8xf32> to vector<1x8xf32>
    %117 = vector.broadcast %116 : vector<1x8xf32> to vector<8x8xf32>
    %118 = arith.addf %114, %117 : vector<8x8xf32>
    %119 = vector.shape_cast %104 : vector<8x8xf32> to vector<1x8x8xf32>
    %120 = vector.shape_cast %111 : vector<8x8xf32> to vector<1x8x8xf32>
    %121 = vector.shape_cast %118 : vector<8x8xf32> to vector<1x8x8xf32>
    "tpu.trace_start"() <{level = 10 : i32, message = "bqe,bke->bqk"}> : () -> ()
    %cst_83 = arith.constant dense<0.000000e+00> : vector<1x8x8xf32>
    %122 = tpu.matmul %119, %120, %cst_83 {dimension_numbers = #tpu.dot_dimension_numbers<[2], [2], [1], [1], [0, 0, 0, 1, 1, 1], [0], [0]>} : vector<1x8x8xf32>, vector<1x8x8xf32>, vector<1x8x8xf32> -> vector<1x8x8xf32>
    "tpu.trace_stop"() : () -> ()
    %cst_84 = arith.constant 0.353553385 : f32
    %123 = vector.broadcast %cst_84 : f32 to vector<1x8x8xf32>
    %124 = arith.mulf %122, %123 : vector<1x8x8xf32>
    %cst_85 = arith.constant dense<0xFF800000> : vector<1x8xf32>
    %125 = vector.multi_reduction <maximumf>, %124, %cst_85 [2] : vector<1x8x8xf32> to vector<1x8xf32>
    %126 = vector.shape_cast %125 : vector<1x8xf32> to vector<1x8x1xf32>
    %127 = vector.broadcast %126 : vector<1x8x1xf32> to vector<1x8x8xf32>
    %128 = arith.subf %124, %127 : vector<1x8x8xf32>
    %129 = math.exp %128 : vector<1x8x8xf32>
    %cst_86 = arith.constant dense<0.000000e+00> : vector<1x8xf32>
    %130 = vector.multi_reduction <add>, %129, %cst_86 [2] : vector<1x8x8xf32> to vector<1x8xf32>
    %131 = vector.shape_cast %130 : vector<1x8xf32> to vector<1x8x1xf32>
    %132 = tpu.reciprocal %131 : vector<1x8x1xf32> -> vector<1x8x1xf32>
    %133 = vector.broadcast %132 : vector<1x8x1xf32> to vector<1x8x8xf32>
    %134 = arith.mulf %129, %133 : vector<1x8x8xf32>
    "tpu.trace_start"() <{level = 10 : i32, message = "bqk,bke->bqe"}> : () -> ()
    %cst_87 = arith.constant dense<0.000000e+00> : vector<1x8x8xf32>
    %135 = tpu.matmul %134, %121, %cst_87 {dimension_numbers = #tpu.dot_dimension_numbers<[2], [1], [1], [2], [0, 0, 0, 1, 1, 2], [0], [0]>} : vector<1x8x8xf32>, vector<1x8x8xf32>, vector<1x8x8xf32> -> vector<1x8x8xf32>
    "tpu.trace_stop"() : () -> ()
    %136 = vector.shape_cast %135 : vector<1x8x8xf32> to vector<8x8xf32>
    %c2_88 = arith.constant 2 : index
    %c0_89 = arith.constant 0 : index
    %c0_90 = arith.constant 0 : index
    %137 = vector.load %arg6[%c2_88, %c0_89, %c0_90] : memref<4x8x32xf32, #tpu.memory_space<vmem>>, vector<1x8x32xf32>
    %138 = vector.shape_cast %137 : vector<1x8x32xf32> to vector<8x32xf32>
    %cst_91 = arith.constant dense<0.000000e+00> : vector<8x32xf32>
    %139 = tpu.matmul %136, %138, %cst_91 {dimension_numbers = #tpu.dot_dimension_numbers<[1], [0], [0], [1], [0, 0, 1, 1], [], []>} : vector<8x8xf32>, vector<8x32xf32>, vector<8x32xf32> -> vector<8x32xf32>
    %140 = arith.addf %97, %139 : vector<8x32xf32>
    %c3 = arith.constant 3 : index
    %c0_92 = arith.constant 0 : index
    %c0_93 = arith.constant 0 : index
    %141 = vector.load %arg4[%c3, %c0_92, %c0_93] : memref<12x32x8xf32, #tpu.memory_space<vmem>>, vector<1x32x8xf32>
    %142 = vector.shape_cast %141 : vector<1x32x8xf32> to vector<32x8xf32>
    %cst_94 = arith.constant dense<0.000000e+00> : vector<8x8xf32>
    %143 = tpu.matmul %3, %142, %cst_94 {dimension_numbers = #tpu.dot_dimension_numbers<[1], [0], [0], [1], [0, 0, 1, 1], [], []>} : vector<8x32xf32>, vector<32x8xf32>, vector<8x8xf32> -> vector<8x8xf32>
    %c3_95 = arith.constant 3 : index
    %c0_96 = arith.constant 0 : index
    %c0_97 = arith.constant 0 : index
    %144 = vector.load %arg5[%c3_95, %c0_96, %c0_97] : memref<12x1x8xf32, #tpu.memory_space<vmem>>, vector<1x1x8xf32>
    %145 = vector.shape_cast %144 : vector<1x1x8xf32> to vector<1x8xf32>
    %146 = vector.broadcast %145 : vector<1x8xf32> to vector<8x8xf32>
    %147 = arith.addf %143, %146 : vector<8x8xf32>
    %c7 = arith.constant 7 : index
    %c0_98 = arith.constant 0 : index
    %c0_99 = arith.constant 0 : index
    %148 = vector.load %arg4[%c7, %c0_98, %c0_99] : memref<12x32x8xf32, #tpu.memory_space<vmem>>, vector<1x32x8xf32>
    %149 = vector.shape_cast %148 : vector<1x32x8xf32> to vector<32x8xf32>
    %cst_100 = arith.constant dense<0.000000e+00> : vector<8x8xf32>
    %150 = tpu.matmul %5, %149, %cst_100 {dimension_numbers = #tpu.dot_dimension_numbers<[1], [0], [0], [1], [0, 0, 1, 1], [], []>} : vector<8x32xf32>, vector<32x8xf32>, vector<8x8xf32> -> vector<8x8xf32>
    %c7_101 = arith.constant 7 : index
    %c0_102 = arith.constant 0 : index
    %c0_103 = arith.constant 0 : index
    %151 = vector.load %arg5[%c7_101, %c0_102, %c0_103] : memref<12x1x8xf32, #tpu.memory_space<vmem>>, vector<1x1x8xf32>
    %152 = vector.shape_cast %151 : vector<1x1x8xf32> to vector<1x8xf32>
    %153 = vector.broadcast %152 : vector<1x8xf32> to vector<8x8xf32>
    %154 = arith.addf %150, %153 : vector<8x8xf32>
    %c11 = arith.constant 11 : index
    %c0_104 = arith.constant 0 : index
    %c0_105 = arith.constant 0 : index
    %155 = vector.load %arg4[%c11, %c0_104, %c0_105] : memref<12x32x8xf32, #tpu.memory_space<vmem>>, vector<1x32x8xf32>
    %156 = vector.shape_cast %155 : vector<1x32x8xf32> to vector<32x8xf32>
    %cst_106 = arith.constant dense<0.000000e+00> : vector<8x8xf32>
    %157 = tpu.matmul %1, %156, %cst_106 {dimension_numbers = #tpu.dot_dimension_numbers<[1], [0], [0], [1], [0, 0, 1, 1], [], []>} : vector<8x32xf32>, vector<32x8xf32>, vector<8x8xf32> -> vector<8x8xf32>
    %c11_107 = arith.constant 11 : index
    %c0_108 = arith.constant 0 : index
    %c0_109 = arith.constant 0 : index
    %158 = vector.load %arg5[%c11_107, %c0_108, %c0_109] : memref<12x1x8xf32, #tpu.memory_space<vmem>>, vector<1x1x8xf32>
    %159 = vector.shape_cast %158 : vector<1x1x8xf32> to vector<1x8xf32>
    %160 = vector.broadcast %159 : vector<1x8xf32> to vector<8x8xf32>
    %161 = arith.addf %157, %160 : vector<8x8xf32>
    %162 = vector.shape_cast %147 : vector<8x8xf32> to vector<1x8x8xf32>
    %163 = vector.shape_cast %154 : vector<8x8xf32> to vector<1x8x8xf32>
    %164 = vector.shape_cast %161 : vector<8x8xf32> to vector<1x8x8xf32>
    "tpu.trace_start"() <{level = 10 : i32, message = "bqe,bke->bqk"}> : () -> ()
    %cst_110 = arith.constant dense<0.000000e+00> : vector<1x8x8xf32>
    %165 = tpu.matmul %162, %163, %cst_110 {dimension_numbers = #tpu.dot_dimension_numbers<[2], [2], [1], [1], [0, 0, 0, 1, 1, 1], [0], [0]>} : vector<1x8x8xf32>, vector<1x8x8xf32>, vector<1x8x8xf32> -> vector<1x8x8xf32>
    "tpu.trace_stop"() : () -> ()
    %cst_111 = arith.constant 0.353553385 : f32
    %166 = vector.broadcast %cst_111 : f32 to vector<1x8x8xf32>
    %167 = arith.mulf %165, %166 : vector<1x8x8xf32>
    %cst_112 = arith.constant dense<0xFF800000> : vector<1x8xf32>
    %168 = vector.multi_reduction <maximumf>, %167, %cst_112 [2] : vector<1x8x8xf32> to vector<1x8xf32>
    %169 = vector.shape_cast %168 : vector<1x8xf32> to vector<1x8x1xf32>
    %170 = vector.broadcast %169 : vector<1x8x1xf32> to vector<1x8x8xf32>
    %171 = arith.subf %167, %170 : vector<1x8x8xf32>
    %172 = math.exp %171 : vector<1x8x8xf32>
    %cst_113 = arith.constant dense<0.000000e+00> : vector<1x8xf32>
    %173 = vector.multi_reduction <add>, %172, %cst_113 [2] : vector<1x8x8xf32> to vector<1x8xf32>
    %174 = vector.shape_cast %173 : vector<1x8xf32> to vector<1x8x1xf32>
    %175 = tpu.reciprocal %174 : vector<1x8x1xf32> -> vector<1x8x1xf32>
    %176 = vector.broadcast %175 : vector<1x8x1xf32> to vector<1x8x8xf32>
    %177 = arith.mulf %172, %176 : vector<1x8x8xf32>
    "tpu.trace_start"() <{level = 10 : i32, message = "bqk,bke->bqe"}> : () -> ()
    %cst_114 = arith.constant dense<0.000000e+00> : vector<1x8x8xf32>
    %178 = tpu.matmul %177, %164, %cst_114 {dimension_numbers = #tpu.dot_dimension_numbers<[2], [1], [1], [2], [0, 0, 0, 1, 1, 2], [0], [0]>} : vector<1x8x8xf32>, vector<1x8x8xf32>, vector<1x8x8xf32> -> vector<1x8x8xf32>
    "tpu.trace_stop"() : () -> ()
    %179 = vector.shape_cast %178 : vector<1x8x8xf32> to vector<8x8xf32>
    %c3_115 = arith.constant 3 : index
    %c0_116 = arith.constant 0 : index
    %c0_117 = arith.constant 0 : index
    %180 = vector.load %arg6[%c3_115, %c0_116, %c0_117] : memref<4x8x32xf32, #tpu.memory_space<vmem>>, vector<1x8x32xf32>
    %181 = vector.shape_cast %180 : vector<1x8x32xf32> to vector<8x32xf32>
    %cst_118 = arith.constant dense<0.000000e+00> : vector<8x32xf32>
    %182 = tpu.matmul %179, %181, %cst_118 {dimension_numbers = #tpu.dot_dimension_numbers<[1], [0], [0], [1], [0, 0, 1, 1], [], []>} : vector<8x8xf32>, vector<8x32xf32>, vector<8x32xf32> -> vector<8x32xf32>
    %183 = arith.addf %140, %182 : vector<8x32xf32>
    %184 = vector.broadcast %7 : vector<1x32xf32> to vector<8x32xf32>
    %185 = arith.addf %183, %184 : vector<8x32xf32>
    %186 = arith.addf %1, %185 : vector<8x32xf32>
    %187 = arith.mulf %186, %186 : vector<8x32xf32>
    %cst_119 = arith.constant dense<0.000000e+00> : vector<8xf32>
    %188 = vector.multi_reduction <add>, %187, %cst_119 [1] : vector<8x32xf32> to vector<8xf32>
    %189 = vector.shape_cast %188 : vector<8xf32> to vector<8x1xf32>
    %190 = math.sqrt %189 : vector<8x1xf32>
    %cst_120 = arith.constant 0.176776692 : f32
    %191 = vector.broadcast %cst_120 : f32 to vector<8x1xf32>
    %192 = arith.mulf %190, %191 : vector<8x1xf32>
    %193 = vector.broadcast %9 : vector<1x32xf32> to vector<8x32xf32>
    %194 = arith.mulf %193, %186 : vector<8x32xf32>
    %cst_121 = arith.constant 9.99999993E-9 : f32
    %195 = vector.broadcast %cst_121 : f32 to vector<8x1xf32>
    %196 = arith.addf %192, %195 : vector<8x1xf32>
    %197 = tpu.reciprocal %196 : vector<8x1xf32> -> vector<8x1xf32>
    %198 = vector.broadcast %197 : vector<8x1xf32> to vector<8x32xf32>
    %199 = arith.mulf %194, %198 : vector<8x32xf32>
    %c0_122 = arith.constant 0 : index
    %c0_123 = arith.constant 0 : index
    %200 = vector.load %arg8[%c0_122, %c0_123] : memref<32x128xf32, #tpu.memory_space<vmem>>, vector<32x128xf32>
    %cst_124 = arith.constant dense<0.000000e+00> : vector<8x128xf32>
    %201 = tpu.matmul %199, %200, %cst_124 {dimension_numbers = #tpu.dot_dimension_numbers<[1], [0], [0], [1], [0, 0, 1, 1], [], []>} : vector<8x32xf32>, vector<32x128xf32>, vector<8x128xf32> -> vector<8x128xf32>
    %c0_125 = arith.constant 0 : index
    %c0_126 = arith.constant 0 : index
    %202 = vector.load %arg9[%c0_125, %c0_126] : memref<1x128xf32, #tpu.memory_space<vmem>>, vector<1x128xf32>
    %203 = vector.broadcast %202 : vector<1x128xf32> to vector<8x128xf32>
    %204 = arith.addf %201, %203 : vector<8x128xf32>
    %cst_127 = arith.constant 5.000000e-01 : f32
    %205 = vector.broadcast %cst_127 : f32 to vector<8x128xf32>
    %206 = arith.mulf %205, %204 : vector<8x128xf32>
    %cst_128 = arith.constant 0.707106769 : f32
    %207 = vector.broadcast %cst_128 : f32 to vector<8x128xf32>
    %208 = arith.mulf %204, %207 : vector<8x128xf32>
    %209 = math.erf %208 : vector<8x128xf32>
    %cst_129 = arith.constant 1.000000e+00 : f32
    %210 = vector.broadcast %cst_129 : f32 to vector<8x128xf32>
    %211 = arith.addf %210, %209 : vector<8x128xf32>
    %212 = arith.mulf %206, %211 : vector<8x128xf32>
    %c0_130 = arith.constant 0 : index
    %c0_131 = arith.constant 0 : index
    %213 = vector.load %arg10[%c0_130, %c0_131] : memref<128x32xf32, #tpu.memory_space<vmem>>, vector<128x32xf32>
    %cst_132 = arith.constant dense<0.000000e+00> : vector<8x32xf32>
    %214 = tpu.matmul %212, %213, %cst_132 {dimension_numbers = #tpu.dot_dimension_numbers<[1], [0], [0], [1], [0, 0, 1, 1], [], []>} : vector<8x128xf32>, vector<128x32xf32>, vector<8x32xf32> -> vector<8x32xf32>
    %215 = vector.broadcast %8 : vector<1x32xf32> to vector<8x32xf32>
    %216 = arith.addf %214, %215 : vector<8x32xf32>
    %217 = arith.addf %199, %216 : vector<8x32xf32>
    %218 = arith.mulf %217, %217 : vector<8x32xf32>
    %cst_133 = arith.constant dense<0.000000e+00> : vector<8xf32>
    %219 = vector.multi_reduction <add>, %218, %cst_133 [1] : vector<8x32xf32> to vector<8xf32>
    %220 = vector.shape_cast %219 : vector<8xf32> to vector<8x1xf32>
    %221 = math.sqrt %220 : vector<8x1xf32>
    %cst_134 = arith.constant 0.176776692 : f32
    %222 = vector.broadcast %cst_134 : f32 to vector<8x1xf32>
    %223 = arith.mulf %221, %222 : vector<8x1xf32>
    %224 = vector.broadcast %10 : vector<1x32xf32> to vector<8x32xf32>
    %225 = arith.mulf %224, %217 : vector<8x32xf32>
    %cst_135 = arith.constant 9.99999993E-9 : f32
    %226 = vector.broadcast %cst_135 : f32 to vector<8x1xf32>
    %227 = arith.addf %223, %226 : vector<8x1xf32>
    %228 = tpu.reciprocal %227 : vector<8x1xf32> -> vector<8x1xf32>
    %229 = vector.broadcast %228 : vector<8x1xf32> to vector<8x32xf32>
    %230 = arith.mulf %225, %229 : vector<8x32xf32>
    %231 = vector.shape_cast %230 : vector<8x32xf32> to vector<1x8x32xf32>
    %c0_136 = arith.constant 0 : index
    %c0_137 = arith.constant 0 : index
    %c0_138 = arith.constant 0 : index
    %232 = vector.load %arg11[%c0_136, %c0_137, %c0_138] : memref<1x8x32xf32, #tpu.memory_space<vmem>>, vector<1x8x32xf32>
    tpu.vector_store %arg11[%c0_136, %c0_137, %c0_138], %231 {strides = array<i32>} : memref<1x8x32xf32, #tpu.memory_space<vmem>>, vector<1x8x32xf32>,
    return
  }
  func.func @transform_0(%arg0: i32) -> (i32, i32, i32) {
    %c0_i32 = arith.constant 0 : i32
    %c0_i32_0 = arith.constant 0 : i32
    %c0_i32_1 = arith.constant 0 : i32
    return %arg0, %c0_i32, %c0_i32_0 : i32, i32, i32
  }
  func.func @transform_1(%arg0: i32) -> (i32, i32, i32) {
    %c0_i32 = arith.constant 0 : i32
    %c0_i32_0 = arith.constant 0 : i32
    %c0_i32_1 = arith.constant 0 : i32
    return %arg0, %c0_i32, %c0_i32_0 : i32, i32, i32
  }
  func.func @transform_2(%arg0: i32) -> (i32, i32, i32) {
    %c0_i32 = arith.constant 0 : i32
    %c0_i32_0 = arith.constant 0 : i32
    %c0_i32_1 = arith.constant 0 : i32
    return %arg0, %c0_i32, %c0_i32_0 : i32, i32, i32
  }
  func.func @transform_3(%arg0: i32) -> (i32, i32, i32) {
    %c0_i32 = arith.constant 0 : i32
    %c0_i32_0 = arith.constant 0 : i32
    %c0_i32_1 = arith.constant 0 : i32
    %c0_i32_2 = arith.constant 0 : i32
    return %c0_i32, %c0_i32_0, %c0_i32_1 : i32, i32, i32
  }
  func.func @transform_4(%arg0: i32) -> (i32, i32, i32) {
    %c0_i32 = arith.constant 0 : i32
    %c0_i32_0 = arith.constant 0 : i32
    %c0_i32_1 = arith.constant 0 : i32
    %c0_i32_2 = arith.constant 0 : i32
    return %c0_i32, %c0_i32_0, %c0_i32_1 : i32, i32, i32
  }
  func.func @transform_5(%arg0: i32) -> (i32, i32, i32) {
    %c0_i32 = arith.constant 0 : i32
    %c0_i32_0 = arith.constant 0 : i32
    %c0_i32_1 = arith.constant 0 : i32
    %c0_i32_2 = arith.constant 0 : i32
    return %c0_i32, %c0_i32_0, %c0_i32_1 : i32, i32, i32
  }
  func.func @transform_6(%arg0: i32) -> (i32, i32) {
    %c0_i32 = arith.constant 0 : i32
    %c0_i32_0 = arith.constant 0 : i32
    %c0_i32_1 = arith.constant 0 : i32
    return %c0_i32, %c0_i32_0 : i32, i32
  }
  func.func @transform_7(%arg0: i32) -> (i32, i32) {
    %c0_i32 = arith.constant 0 : i32
    %c0_i32_0 = arith.constant 0 : i32
    %c0_i32_1 = arith.constant 0 : i32
    return %c0_i32, %c0_i32_0 : i32, i32
  }
  func.func @transform_8(%arg0: i32) -> (i32, i32) {
    %c0_i32 = arith.constant 0 : i32
    %c0_i32_0 = arith.constant 0 : i32
    %c0_i32_1 = arith.constant 0 : i32
    return %c0_i32, %c0_i32_0 : i32, i32
  }
  func.func @transform_9(%arg0: i32) -> (i32, i32) {
    %c0_i32 = arith.constant 0 : i32
    %c0_i32_0 = arith.constant 0 : i32
    %c0_i32_1 = arith.constant 0 : i32
    return %c0_i32, %c0_i32_0 : i32, i32
  }
  func.func @transform_10(%arg0: i32) -> (i32, i32, i32) {
    %c0_i32 = arith.constant 0 : i32
    %c0_i32_0 = arith.constant 0 : i32
    %c0_i32_1 = arith.constant 0 : i32
    return %arg0, %c0_i32, %c0_i32_0 : i32, i32, i32
  }
}

</mosaic_0001>

<llo_original>
// kernel: tpu_custom_call.1
$region0: #{tpu_custom_call.1}
  #allocation0 [shape = 'u32[]', space=smem, size = 0x4, offset = 0x4, fixed_abs, tag = 'smem constant byte address 0x4 - core index']
  #allocation1 [shape = 'u32[72,128]{1,0:T(1,128)}', space=vmem, size = 0x9000, scoped, tag = 'internal scratch']
  %s0 = inlined_call_operand.vmem [shape: f32[2,8,32], index: 0, kind: input, shape index: {}]
  %s1 = inlined_call_operand.vmem [shape: f32[2,8,32], index: 1, kind: input, shape index: {}]
  %s2 = inlined_call_operand.vmem [shape: f32[2,8,32], index: 2, kind: input, shape index: {}]
  %s3 = inlined_call_operand.vmem [shape: f32[12,32,8], index: 3, kind: input, shape index: {}]
  %s4 = inlined_call_operand.vmem [shape: f32[12,1,8], index: 4, kind: input, shape index: {}]
  %s5 = inlined_call_operand.vmem [shape: f32[4,8,32], index: 5, kind: input, shape index: {}]
  %s6 = inlined_call_operand.vmem [shape: f32[4,32], index: 6, kind: input, shape index: {}]
  %s7 = inlined_call_operand.vmem [shape: f32[32,128], index: 7, kind: input, shape index: {}]
  %s8 = inlined_call_operand.vmem [shape: f32[1,128], index: 8, kind: input, shape index: {}]
  %s9 = inlined_call_operand.vmem [shape: f32[128,32], index: 9, kind: input, shape index: {}]
  %s10 = inlined_call_operand.hbm [shape: f32[2,8,32], index: 10, kind: output, shape index: {}]
  %s11 = sld [smem:[#allocation0]]
  $region73: #{tpu_custom_call.1} parent=0
    _
  %s13 = ssub.s32 1, %s11
  %s14 = scalar_select 0, %s13, %s11
  $region1: #{tpu_custom_call.1} parent=0
    #allocation2 [shape = 'u8[8192]{0}', space=vmem, size = 0x2000, scoped, tag = 'output window, operand 0']
    #allocation3 [shape = 's32[2]{0}', space=sflag, size = 0x8, scoped, tag = 'scoped memory for tpu_custom_call.1']
    %15 = vsyncpa [#allocation3], 0
    %s16 = scalar_lea.sflag [#allocation3], 1
    %17 = vsyncpa %s16, 0
    loop: start=0, step=1, limit=4
    $region2: #{tpu_custom_call.1} parent=1 // loop_pre_header
      _
    $region3: #{tpu_custom_call.1} parent=1 // loop_header
      %s19 = sphi 0, %s23
      %p20 = scmp.ge.s32.totalorder %s19, 4
      %s29 = sphi 0, %s31
      %s32 = sphi 0, %s29
      %s33 = sphi 0, %s32
      %s49 = sphi 0, %s33
      %s55 = sphi 0, %s57
      %s58 = sphi 0, %s55
      %s59 = sphi 0, %s58
      %s75 = sphi 0, %s59
      %s81 = sphi 0, %s83
      %s84 = sphi 0, %s81
      %s85 = sphi 0, %s84
      %s101 = sphi 0, %s85
      %s105 = sphi 0, %s105
      %s107 = sphi 0, %s105
      %s108 = sphi 0, %s107
      %s122 = sphi 0, %s108
      %s126 = sphi 0, %s126
      %s128 = sphi 0, %s126
      %s129 = sphi 0, %s128
      %s143 = sphi 0, %s129
      %s147 = sphi 0, %s147
      %s149 = sphi 0, %s147
      %s150 = sphi 0, %s149
      %s164 = sphi 0, %s150
      %s168 = sphi 0, %s168
      %s170 = sphi 0, %s168
      %s171 = sphi 0, %s170
      %s185 = sphi 0, %s171
      %s189 = sphi 0, %s189
      %s191 = sphi 0, %s189
      %s192 = sphi 0, %s191
      %s206 = sphi 0, %s192
      %s210 = sphi 0, %s210
      %s212 = sphi 0, %s210
      %s213 = sphi 0, %s212
      %s227 = sphi 0, %s213
      %s231 = sphi 0, %s231
      %s233 = sphi 0, %s231
      %s234 = sphi 0, %s233
      %s248 = sphi 0, %s234
      %s254 = sphi 0, %s256
      %s257 = sphi 0, %s254
      %s258 = sphi 0, %s257
      %s274 = sphi 0, %s258
    $region4: #{tpu_custom_call.1} parent=1 // loop_header_branch
      %22 = sbr.rel (%p20) target = $region8
    $region5: #{tpu_custom_call.1} parent=1 // loop_body
      %s24 = ssub.s32 %s19, 1
      %s25 = ssub.s32 %s19, 2
      %s26 = sadd.s32 %s19, 1
      %s27 = ssub.s32 %s19, %s26
      %p28 = scmp.eq.s32.totalorder %s27, 0
      %s30 = sadd.s32 %s29, 1
      %s31 = scalar_select %p28, %s29, %s30
      %p34 = pneg %p28
      %p35 = scmp.eq.s32.totalorder %s19, 1
      %p36 = por %p34, %p35
      %p37 = scmp.ne.s32.totalorder %s29, %s32
      %p38 = scmp.eq.s32.totalorder %s19, 0
      %p39 = por %p37, %p38
      %p40 = scmp.ne.s32.totalorder %s29, %s32
      %p41 = scmp.eq.s32.totalorder %s24, 1
      %p42 = por %p40, %p41
      %p43 = scmp.ne.s32.totalorder %s32, %s33
      %p44 = scmp.eq.s32.totalorder %s24, 0
      %p45 = por %p43, %p44
      %p46 = scmp.ne.s32.totalorder %s32, %s33
      %p47 = scmp.eq.s32.totalorder %s25, 1
      %p48 = por %p46, %p47
      %p50 = scmp.ne.s32.totalorder %s33, %s49
      %p51 = scmp.eq.s32.totalorder %s25, 0
      %p52 = por %p50, %p51
      %s53 = ssub.s32 %s19, %s26
      %p54 = scmp.eq.s32.totalorder %s53, 0
      %s56 = sadd.s32 %s55, 1
      %s57 = scalar_select %p54, %s55, %s56
      %p60 = pneg %p54
      %p61 = scmp.eq.s32.totalorder %s19, 1
      %p62 = por %p60, %p61
      %p63 = scmp.ne.s32.totalorder %s55, %s58
      %p64 = scmp.eq.s32.totalorder %s19, 0
      %p65 = por %p63, %p64
      %p66 = scmp.ne.s32.totalorder %s55, %s58
      %p67 = scmp.eq.s32.totalorder %s24, 1
      %p68 = por %p66, %p67
      %p69 = scmp.ne.s32.totalorder %s58, %s59
      %p70 = scmp.eq.s32.totalorder %s24, 0
      %p71 = por %p69, %p70
      %p72 = scmp.ne.s32.totalorder %s58, %s59
      %p73 = scmp.eq.s32.totalorder %s25, 1
      %p74 = por %p72, %p73
      %p76 = scmp.ne.s32.totalorder %s59, %s75
      %p77 = scmp.eq.s32.totalorder %s25, 0
      %p78 = por %p76, %p77
      %s79 = ssub.s32 %s19, %s26
      %p80 = scmp.eq.s32.totalorder %s79, 0
      %s82 = sadd.s32 %s81, 1
      %s83 = scalar_select %p80, %s81, %s82
      %p86 = pneg %p80
      %p87 = scmp.eq.s32.totalorder %s19, 1
      %p88 = por %p86, %p87
      %p89 = scmp.ne.s32.totalorder %s81, %s84
      %p90 = scmp.eq.s32.totalorder %s19, 0
      %p91 = por %p89, %p90
      %p92 = scmp.ne.s32.totalorder %s81, %s84
      %p93 = scmp.eq.s32.totalorder %s24, 1
      %p94 = por %p92, %p93
      %p95 = scmp.ne.s32.totalorder %s84, %s85
      %p96 = scmp.eq.s32.totalorder %s24, 0
      %p97 = por %p95, %p96
      %p98 = scmp.ne.s32.totalorder %s84, %s85
      %p99 = scmp.eq.s32.totalorder %s25, 1
      %p100 = por %p98, %p99
      %p102 = scmp.ne.s32.totalorder %s85, %s101
      %p103 = scmp.eq.s32.totalorder %s25, 0
      %p104 = por %p102, %p103
      %s106 = sadd.s32 %s105, 1
      %p109 = scmp.eq.s32.totalorder %s19, 1
      %p110 = scmp.ne.s32.totalorder %s105, %s107
      %p111 = scmp.eq.s32.totalorder %s19, 0
      %p112 = por %p110, %p111
      %p113 = scmp.ne.s32.totalorder %s105, %s107
      %p114 = scmp.eq.s32.totalorder %s24, 1
      %p115 = por %p113, %p114
      %p116 = scmp.ne.s32.totalorder %s107, %s108
      %p117 = scmp.eq.s32.totalorder %s24, 0
      %p118 = por %p116, %p117
      %p119 = scmp.ne.s32.totalorder %s107, %s108
      %p120 = scmp.eq.s32.totalorder %s25, 1
      %p121 = por %p119, %p120
      %p123 = scmp.ne.s32.totalorder %s108, %s122
      %p124 = scmp.eq.s32.totalorder %s25, 0
      %p125 = por %p123, %p124
      %s127 = sadd.s32 %s126, 1
      %p130 = scmp.eq.s32.totalorder %s19, 1
      %p131 = scmp.ne.s32.totalorder %s126, %s128
      %p132 = scmp.eq.s32.totalorder %s19, 0
      %p133 = por %p131, %p132
      %p134 = scmp.ne.s32.totalorder %s126, %s128
      %p135 = scmp.eq.s32.totalorder %s24, 1
      %p136 = por %p134, %p135
      %p137 = scmp.ne.s32.totalorder %s128, %s129
      %p138 = scmp.eq.s32.totalorder %s24, 0
      %p139 = por %p137, %p138
      %p140 = scmp.ne.s32.totalorder %s128, %s129
      %p141 = scmp.eq.s32.totalorder %s25, 1
      %p142 = por %p140, %p141
      %p144 = scmp.ne.s32.totalorder %s129, %s143
      %p145 = scmp.eq.s32.totalorder %s25, 0
      %p146 = por %p144, %p145
      %s148 = sadd.s32 %s147, 1
      %p151 = scmp.eq.s32.totalorder %s19, 1
      %p152 = scmp.ne.s32.totalorder %s147, %s149
      %p153 = scmp.eq.s32.totalorder %s19, 0
      %p154 = por %p152, %p153
      %p155 = scmp.ne.s32.totalorder %s147, %s149
      %p156 = scmp.eq.s32.totalorder %s24, 1
      %p157 = por %p155, %p156
      %p158 = scmp.ne.s32.totalorder %s149, %s150
      %p159 = scmp.eq.s32.totalorder %s24, 0
      %p160 = por %p158, %p159
      %p161 = scmp.ne.s32.totalorder %s149, %s150
      %p162 = scmp.eq.s32.totalorder %s25, 1
      %p163 = por %p161, %p162
      %p165 = scmp.ne.s32.totalorder %s150, %s164
      %p166 = scmp.eq.s32.totalorder %s25, 0
      %p167 = por %p165, %p166
      %s169 = sadd.s32 %s168, 1
      %p172 = scmp.eq.s32.totalorder %s19, 1
      %p173 = scmp.ne.s32.totalorder %s168, %s170
      %p174 = scmp.eq.s32.totalorder %s19, 0
      %p175 = por %p173, %p174
      %p176 = scmp.ne.s32.totalorder %s168, %s170
      %p177 = scmp.eq.s32.totalorder %s24, 1
      %p178 = por %p176, %p177
      %p179 = scmp.ne.s32.totalorder %s170, %s171
      %p180 = scmp.eq.s32.totalorder %s24, 0
      %p181 = por %p179, %p180
      %p182 = scmp.ne.s32.totalorder %s170, %s171
      %p183 = scmp.eq.s32.totalorder %s25, 1
      %p184 = por %p182, %p183
      %p186 = scmp.ne.s32.totalorder %s171, %s185
      %p187 = scmp.eq.s32.totalorder %s25, 0
      %p188 = por %p186, %p187
      %s190 = sadd.s32 %s189, 1
      %p193 = scmp.eq.s32.totalorder %s19, 1
      %p194 = scmp.ne.s32.totalorder %s189, %s191
      %p195 = scmp.eq.s32.totalorder %s19, 0
      %p196 = por %p194, %p195
      %p197 = scmp.ne.s32.totalorder %s189, %s191
      %p198 = scmp.eq.s32.totalorder %s24, 1
      %p199 = por %p197, %p198
      %p200 = scmp.ne.s32.totalorder %s191, %s192
      %p201 = scmp.eq.s32.totalorder %s24, 0
      %p202 = por %p200, %p201
      %p203 = scmp.ne.s32.totalorder %s191, %s192
      %p204 = scmp.eq.s32.totalorder %s25, 1
      %p205 = por %p203, %p204
      %p207 = scmp.ne.s32.totalorder %s192, %s206
      %p208 = scmp.eq.s32.totalorder %s25, 0
      %p209 = por %p207, %p208
      %s211 = sadd.s32 %s210, 1
      %p214 = scmp.eq.s32.totalorder %s19, 1
      %p215 = scmp.ne.s32.totalorder %s210, %s212
      %p216 = scmp.eq.s32.totalorder %s19, 0
      %p217 = por %p215, %p216
      %p218 = scmp.ne.s32.totalorder %s210, %s212
      %p219 = scmp.eq.s32.totalorder %s24, 1
      %p220 = por %p218, %p219
      %p221 = scmp.ne.s32.totalorder %s212, %s213
      %p222 = scmp.eq.s32.totalorder %s24, 0
      %p223 = por %p221, %p222
      %p224 = scmp.ne.s32.totalorder %s212, %s213
      %p225 = scmp.eq.s32.totalorder %s25, 1
      %p226 = por %p224, %p225
      %p228 = scmp.ne.s32.totalorder %s213, %s227
      %p229 = scmp.eq.s32.totalorder %s25, 0
      %p230 = por %p228, %p229
      %s232 = sadd.s32 %s231, 1
      %p235 = scmp.eq.s32.totalorder %s19, 1
      %p236 = scmp.ne.s32.totalorder %s231, %s233
      %p237 = scmp.eq.s32.totalorder %s19, 0
      %p238 = por %p236, %p237
      %p239 = scmp.ne.s32.totalorder %s231, %s233
      %p240 = scmp.eq.s32.totalorder %s24, 1
      %p241 = por %p239, %p240
      %p242 = scmp.ne.s32.totalorder %s233, %s234
      %p243 = scmp.eq.s32.totalorder %s24, 0
      %p244 = por %p242, %p243
      %p245 = scmp.ne.s32.totalorder %s233, %s234
      %p246 = scmp.eq.s32.totalorder %s25, 1
      %p247 = por %p245, %p246
      %p249 = scmp.ne.s32.totalorder %s234, %s248
      %p250 = scmp.eq.s32.totalorder %s25, 0
      %p251 = por %p249, %p250
      %s252 = ssub.s32 %s19, %s26
      %p253 = scmp.eq.s32.totalorder %s252, 0
      %s255 = sadd.s32 %s254, 1
      %s256 = scalar_select %p253, %s254, %s255
      %p259 = pneg %p253
      %p260 = scmp.eq.s32.totalorder %s19, 1
      %p261 = por %p259, %p260
      %p262 = scmp.ne.s32.totalorder %s254, %s257
      %p263 = scmp.eq.s32.totalorder %s19, 0
      %p264 = por %p262, %p263
      %p265 = scmp.ne.s32.totalorder %s254, %s257
      %p266 = scmp.eq.s32.totalorder %s24, 1
      %p267 = por %p265, %p266
      %p268 = scmp.ne.s32.totalorder %s257, %s258
      %p269 = scmp.eq.s32.totalorder %s24, 0
      %p270 = por %p268, %p269
      %p271 = scmp.ne.s32.totalorder %s257, %s258
      %p272 = scmp.eq.s32.totalorder %s25, 1
      %p273 = por %p271, %p272
      %p275 = scmp.ne.s32.totalorder %s258, %s274
      %p276 = scmp.eq.s32.totalorder %s25, 0
      %p277 = por %p275, %p276
      %p278 = scmp.le.s32.totalorder 1, %s19
      %p279 = scmp.lt.s32.totalorder %s19, 3
      %p280 = pnand %p278, %p279
      %p281 = pneg %p280
      // Predicated region
      $region9: #{tpu_custom_call.1} parent=5 // pred_check
        _
      $region10: #{tpu_custom_call.1} parent=5 // pred_check_branch
        %283 = sbr.rel (%p280) target = $region12
      $region11: #{tpu_custom_call.1} parent=5 // pred_region
        %s284 = ssub.s32 %s19, 1
        // Predicated region
        $region13: #{tpu_custom_call.1} parent=11 // pred_check
          %p285 = pneg %p118
        $region14: #{tpu_custom_call.1} parent=11 // pred_check_branch
          %287 = sbr.rel (%p285) target = $region16
        $region15: #{tpu_custom_call.1} parent=11 // pred_region
          _
        $region16: #{tpu_custom_call.1} parent=11 // pred_fallthru
          _
        // Predicated region
        $region17: #{tpu_custom_call.1} parent=11 // pred_check
          %p288 = pneg %p139
        $region18: #{tpu_custom_call.1} parent=11 // pred_check_branch
          %290 = sbr.rel (%p288) target = $region20
        $region19: #{tpu_custom_call.1} parent=11 // pred_region
          _
        $region20: #{tpu_custom_call.1} parent=11 // pred_fallthru
          _
        // Predicated region
        $region21: #{tpu_custom_call.1} parent=11 // pred_check
          %p291 = pneg %p160
        $region22: #{tpu_custom_call.1} parent=11 // pred_check_branch
          %293 = sbr.rel (%p291) target = $region24
        $region23: #{tpu_custom_call.1} parent=11 // pred_region
          _
        $region24: #{tpu_custom_call.1} parent=11 // pred_fallthru
          _
        // Predicated region
        $region25: #{tpu_custom_call.1} parent=11 // pred_check
          %p294 = pneg %p181
        $region26: #{tpu_custom_call.1} parent=11 // pred_check_branch
          %296 = sbr.rel (%p294) target = $region28
        $region27: #{tpu_custom_call.1} parent=11 // pred_region
          _
        $region28: #{tpu_custom_call.1} parent=11 // pred_fallthru
          _
        // Predicated region
        $region29: #{tpu_custom_call.1} parent=11 // pred_check
          %p297 = pneg %p202
        $region30: #{tpu_custom_call.1} parent=11 // pred_check_branch
          %299 = sbr.rel (%p297) target = $region32
        $region31: #{tpu_custom_call.1} parent=11 // pred_region
          _
        $region32: #{tpu_custom_call.1} parent=11 // pred_fallthru
          _
        // Predicated region
        $region33: #{tpu_custom_call.1} parent=11 // pred_check
          %p300 = pneg %p223
        $region34: #{tpu_custom_call.1} parent=11 // pred_check_branch
          %302 = sbr.rel (%p300) target = $region36
        $region35: #{tpu_custom_call.1} parent=11 // pred_region
          _
        $region36: #{tpu_custom_call.1} parent=11 // pred_fallthru
          _
        // Predicated region
        $region37: #{tpu_custom_call.1} parent=11 // pred_check
          %p303 = pneg %p244
        $region38: #{tpu_custom_call.1} parent=11 // pred_check_branch
          %305 = sbr.rel (%p303) target = $region40
        $region39: #{tpu_custom_call.1} parent=11 // pred_region
          _
        $region40: #{tpu_custom_call.1} parent=11 // pred_fallthru
          _
      $region12: #{tpu_custom_call.1} parent=5 // pred_fallthru
        _
      %p306 = scmp.lt.s32.totalorder %s19, 2
      // Predicated region
      $region41: #{tpu_custom_call.1} parent=5 // pred_check
        %p307 = pneg %p306
      $region42: #{tpu_custom_call.1} parent=5 // pred_check_branch
        %309 = sbr.rel (%p307) target = $region44
      $region43: #{tpu_custom_call.1} parent=5 // pred_region
        // Predicated region
        $region45: #{tpu_custom_call.1} parent=43 // pred_check
          %p310 = pneg %p39
        $region46: #{tpu_custom_call.1} parent=43 // pred_check_branch
          %312 = sbr.rel (%p310) target = $region48
        $region47: #{tpu_custom_call.1} parent=43 // pred_region
          %p313 = scmp.lt.s32.totalorder %s19, 1
          %s314 = scalar_select %p313, %s19, 1
          %s315 = smul.addr %s314, 8
          %s316 = scalar_lea.vmem %s0, %s315
        $region48: #{tpu_custom_call.1} parent=43 // pred_fallthru
          _
        // Predicated region
        $region49: #{tpu_custom_call.1} parent=43 // pred_check
          %p317 = pneg %p65
        $region50: #{tpu_custom_call.1} parent=43 // pred_check_branch
          %319 = sbr.rel (%p317) target = $region52
        $region51: #{tpu_custom_call.1} parent=43 // pred_region
          %p320 = scmp.lt.s32.totalorder %s19, 1
          %s321 = scalar_select %p320, %s19, 1
          %s322 = smul.addr %s321, 8
          %s323 = scalar_lea.vmem %s1, %s322
        $region52: #{tpu_custom_call.1} parent=43 // pred_fallthru
          _
        // Predicated region
        $region53: #{tpu_custom_call.1} parent=43 // pred_check
          %p324 = pneg %p91
        $region54: #{tpu_custom_call.1} parent=43 // pred_check_branch
          %326 = sbr.rel (%p324) target = $region56
        $region55: #{tpu_custom_call.1} parent=43 // pred_region
          %p327 = scmp.lt.s32.totalorder %s19, 1
          %s328 = scalar_select %p327, %s19, 1
          %s329 = smul.addr %s328, 8
          %s330 = scalar_lea.vmem %s2, %s329
        $region56: #{tpu_custom_call.1} parent=43 // pred_fallthru
          _
      $region44: #{tpu_custom_call.1} parent=5 // pred_fallthru
        _
      %p331 = scmp.le.s32.totalorder 1, %s19
      %p332 = scmp.lt.s32.totalorder %s19, 3
      %p333 = pnand %p331, %p332
      %p334 = pneg %p333
      // Predicated region
      $region57: #{tpu_custom_call.1} parent=5 // pred_check
        _
      $region58: #{tpu_custom_call.1} parent=5 // pred_check_branch
        %336 = sbr.rel (%p333) target = $region60
      $region59: #{tpu_custom_call.1} parent=5 // pred_region
        %s337 = ssub.s32 %s19, 1
        %p338 = scmp.lt.s32.totalorder %s24, 1
        %s339 = scalar_select %p338, %s24, 1
        %s340 = smul.addr %s339, 8
        %s341 = scalar_lea.vmem %s0, %s340
        %p342 = pneg %p45
        %p343 = pneg %p42
        %p344 = scmp.lt.s32.totalorder %s24, 1
        %s345 = scalar_select %p344, %s24, 1
        %s346 = smul.addr %s345, 8
        %s347 = scalar_lea.vmem %s1, %s346
        %p348 = pneg %p71
        %p349 = pneg %p68
        %p350 = scmp.lt.s32.totalorder %s24, 1
        %s351 = scalar_select %p350, %s24, 1
        %s352 = smul.addr %s351, 8
        %s353 = scalar_lea.vmem %s2, %s352
        %p354 = pneg %p97
        %p355 = pneg %p94
        %p356 = pneg %p118
        %p357 = pneg %p115
        %p358 = pneg %p139
        %p359 = pneg %p136
        %p360 = pneg %p160
        %p361 = pneg %p157
        %p362 = pneg %p181
        %p363 = pneg %p178
        %p364 = pneg %p202
        %p365 = pneg %p199
        %p366 = pneg %p223
        %p367 = pneg %p220
        %p368 = pneg %p244
        %p369 = pneg %p241
        %p370 = pneg %p270
        %p371 = pneg %p267
        %s372 = sand.u32 %s257, 1
        %s373 = scalar_lea.sflag [#allocation3], %s372
        %s374 = sand.u32 %s257, 1
        %s375 = smul.addr %s374, 8
        %s376 = scalar_lea.vmem [#allocation2], %s375
        %p377 = scmp.lt.s32.totalorder %s24, 1
        %s378 = scalar_select %p377, %s24, 1
        %s379 = smul.addr %s378, 8
        %s380 = scalar_lea.vmem %s0, %s379
        %p381 = scmp.lt.s32.totalorder %s24, 1
        %s382 = scalar_select %p381, %s24, 1
        %s383 = smul.addr %s382, 8
        %s384 = scalar_lea.vmem %s1, %s383
        %p385 = scmp.lt.s32.totalorder %s24, 1
        %s386 = scalar_select %p385, %s24, 1
        %s387 = smul.addr %s386, 8
        %s388 = scalar_lea.vmem %s2, %s387
        %v389 = vld [vmem:[%s380] sm:$0xff]
        %v390 = vld [vmem:[%s384] sm:$0xff]
        %v391 = vld [vmem:[%s388] sm:$0xff]
        %v392 = vld [vmem:[%s6] sm:$0xf]
        %v393 = vld [vmem:[%s3] sm:$0xff]
        %v394 = vld [vmem:[%s3 + $0x8] sm:$0xff]
        %v395 = vld [vmem:[%s3 + $0x10] sm:$0xff]
        %v396 = vld [vmem:[%s3 + $0x18] sm:$0xff]
        %v397 = vld [vmem:[%s4] sm:$0x1]
        %v399 = vperm.slane %v397, 0
        %vm401 = vcmask 261120
        %v403 = vsel %vm401, %v390, 0
        %405 = vmatpush.msra.mxu0 0.0
        %406 = vmatpush.msra.mxu0 0.0
        %407 = vmatpush.msra.mxu0 0.0
        %408 = vmatpush.msra.mxu0 0.0
        %409 = vmatpush.msra.mxu0 0.0
        %410 = vmatpush.msra.mxu0 0.0
        %411 = vmatpush.msra.mxu0 0.0
        %412 = vmatpush.msra.mxu0 0.0
        %413 = vmatpush.msra.mxu0 0.0
        %414 = vmatpush.msra.mxu0 0.0
        %415 = vmatpush.msra.mxu0 0.0
        %416 = vmatpush.msra.mxu0 0.0
        %417 = vmatpush.msra.mxu0 %v396
        %418 = vmatpush.msra.mxu0 %v395
        %419 = vmatpush.msra.mxu0 %v394
        %420 = vmatpush.msra.mxu0 %v393
        %421 = vmatmul.f32.gmra.mxu0 %v403
        %v422 = vpop.f32.mrf.mxu0
        %v423 = vadd.f32 %v399, %v422
        %424 = vdwg.mxu0
        %s425 = scalar_lea.vmem %s3, 128
        %v426 = vld [vmem:[%s425] sm:$0xff]
        %v427 = vld [vmem:[%s425 + $0x8] sm:$0xff]
        %v428 = vld [vmem:[%s425 + $0x10] sm:$0xff]
        %v429 = vld [vmem:[%s425 + $0x18] sm:$0xff]
        %s430 = scalar_lea.vmem %s4, 4
        %v431 = vld [vmem:[%s430] sm:$0x1]
        %v433 = vperm.slane %v431, 0
        %v436 = vsel %vm401, %v391, 0
        %438 = vmatpush.msra.mxu0 0.0
        %439 = vmatpush.msra.mxu0 0.0
        %440 = vmatpush.msra.mxu0 0.0
        %441 = vmatpush.msra.mxu0 0.0
        %442 = vmatpush.msra.mxu0 0.0
        %443 = vmatpush.msra.mxu0 0.0
        %444 = vmatpush.msra.mxu0 0.0
        %445 = vmatpush.msra.mxu0 0.0
        %446 = vmatpush.msra.mxu0 0.0
        %447 = vmatpush.msra.mxu0 0.0
        %448 = vmatpush.msra.mxu0 0.0
        %449 = vmatpush.msra.mxu0 0.0
        %450 = vmatpush.msra.mxu0 %v429
        %451 = vmatpush.msra.mxu0 %v428
        %452 = vmatpush.msra.mxu0 %v427
        %453 = vmatpush.msra.mxu0 %v426
        %454 = vmatmul.f32.gmra.mxu0 %v436
        %v455 = vpop.f32.mrf.mxu0
        %v456 = vadd.f32 %v433, %v455
        %457 = vdwg.mxu0
        %s458 = scalar_lea.vmem %s3, 256
        %v459 = vld [vmem:[%s458] sm:$0xff]
        %v460 = vld [vmem:[%s458 + $0x8] sm:$0xff]
        %v461 = vld [vmem:[%s458 + $0x10] sm:$0xff]
        %v462 = vld [vmem:[%s458 + $0x18] sm:$0xff]
        %s463 = scalar_lea.vmem %s4, 8
        %v464 = vld [vmem:[%s463] sm:$0x1]
        %v466 = vperm.slane %v464, 0
        %v469 = vsel %vm401, %v389, 0
        %471 = vmatpush.msra.mxu0 0.0
        %472 = vmatpush.msra.mxu0 0.0
        %473 = vmatpush.msra.mxu0 0.0
        %474 = vmatpush.msra.mxu0 0.0
        %475 = vmatpush.msra.mxu0 0.0
        %476 = vmatpush.msra.mxu0 0.0
        %477 = vmatpush.msra.mxu0 0.0
        %478 = vmatpush.msra.mxu0 0.0
        %479 = vmatpush.msra.mxu0 0.0
        %480 = vmatpush.msra.mxu0 0.0
        %481 = vmatpush.msra.mxu0 0.0
        %482 = vmatpush.msra.mxu0 0.0
        %483 = vmatpush.msra.mxu0 %v462
        %484 = vmatpush.msra.mxu0 %v461
        %485 = vmatpush.msra.mxu0 %v460
        %486 = vmatpush.msra.mxu0 %v459
        %487 = vmatmul.f32.gmra.mxu0 %v469
        %v488 = vpop.f32.mrf.mxu0
        %v489 = vadd.f32 %v466, %v488
        %490 = vdwg.mxu0
        %vm491 = vcmask 64512
        %v493 = vsel %vm491, %v423, 0
        %v496 = vsel %vm491, %v456, 0
        %498 = vmatpush.xpose.msra.mxu0 0.0
        %499 = vmatpush.xpose.msra.mxu0 0.0
        %500 = vmatpush.xpose.msra.mxu0 0.0
        %501 = vmatpush.xpose.msra.mxu0 0.0
        %502 = vmatpush.xpose.msra.mxu0 0.0
        %503 = vmatpush.xpose.msra.mxu0 0.0
        %504 = vmatpush.xpose.msra.mxu0 0.0
        %505 = vmatpush.xpose.msra.mxu0 0.0
        %506 = vmatpush.xpose.msra.mxu0 0.0
        %507 = vmatpush.xpose.msra.mxu0 0.0
        %508 = vmatpush.xpose.msra.mxu0 0.0
        %509 = vmatpush.xpose.msra.mxu0 0.0
        %510 = vmatpush.xpose.msra.mxu0 0.0
        %511 = vmatpush.xpose.msra.mxu0 0.0
        %512 = vmatpush.xpose.msra.mxu0 0.0
        %513 = vmatpush.xpose.msra.mxu0 %v496
        %514 = vmatmul.f32.gmra.mxu0 %v493
        %v515 = vpop.f32.mrf.mxu0
        %v516 = vadd.f32 0.0, %v515
        %517 = vdwg.mxu0
        %v518 = vmul.f32 %v516, 0.35355338
        %v519 = vsel %vm491, %v518, -inf
        %520 = vmax.xlane.f32.xlu0 %v519
        %v521 = vpop.xlane.xlu0 %520
        %v522 = vsub.f32 %v518, %v521
        %v523 = vmul.f32 %v522, 1.442695
        %v524 = vpow.pop %v523
        %v525 = vsel %vm491, %v524, 0.0
        %526 = vadd.xlane.f32.xlu0 %v525
        %v527 = vpop.xlane.xlu0 %526
        %v528 = vrcp.pop %v527
        %v529 = vmul.f32 %v527, %v528
        %v530 = vsub.f32 1.0, %v529
        %v531 = vmul.f32 %v528, %v530
        %v532 = vadd.f32 %v528, %v531
        %vm533 = vweird.f32 %v527
        %vm534 = vweird.f32 %v528
        %vm535 = vmor %vm533, %vm534
        %v536 = vsel %vm535, %v528, %v532
        %v537 = vand.u32 2147483647, %v527
        %vm538 = vcmp.eq.f32.partialorder %v537, 8.507059e+37
        %v539 = vand.u32 %v527, 2147483648
        %v540 = vor.u32 1.1754944e-38, %v539
        %v541 = vsel %vm538, %v540, %v536
        %v542 = vmul.f32 %v524, %v541
        %v544 = vsel %vm491, %v542, 0
        %546 = vmatpush.msra.mxu0 0.0
        %547 = vmatpush.msra.mxu0 0.0
        %548 = vmatpush.msra.mxu0 0.0
        %549 = vmatpush.msra.mxu0 0.0
        %550 = vmatpush.msra.mxu0 0.0
        %551 = vmatpush.msra.mxu0 0.0
        %552 = vmatpush.msra.mxu0 0.0
        %553 = vmatpush.msra.mxu0 0.0
        %554 = vmatpush.msra.mxu0 0.0
        %555 = vmatpush.msra.mxu0 0.0
        %556 = vmatpush.msra.mxu0 0.0
        %557 = vmatpush.msra.mxu0 0.0
        %558 = vmatpush.msra.mxu0 0.0
        %559 = vmatpush.msra.mxu0 0.0
        %560 = vmatpush.msra.mxu0 0.0
        %561 = vmatpush.msra.mxu0 %v489
        %562 = vmatmul.f32.gmra.mxu0 %v544
        %v563 = vpop.f32.mrf.mxu0
        %v564 = vadd.f32 0.0, %v563
        %565 = vdwg.mxu0
        %v566 = vld [vmem:[%s5] sm:$0xff]
        %s567 = scalar_lea.vmem %s3, 32
        %v568 = vld [vmem:[%s567] sm:$0xff]
        %v569 = vld [vmem:[%s567 + $0x8] sm:$0xff]
        %v570 = vld [vmem:[%s567 + $0x10] sm:$0xff]
        %v571 = vld [vmem:[%s567 + $0x18] sm:$0xff]
        %s572 = scalar_lea.vmem %s4, 1
        %v573 = vld [vmem:[%s572] sm:$0x1]
        %v575 = vperm.slane %v573, 0
        %577 = vmatpush.msra.mxu0 0.0
        %578 = vmatpush.msra.mxu0 0.0
        %579 = vmatpush.msra.mxu0 0.0
        %580 = vmatpush.msra.mxu0 0.0
        %581 = vmatpush.msra.mxu0 0.0
        %582 = vmatpush.msra.mxu0 0.0
        %583 = vmatpush.msra.mxu0 0.0
        %584 = vmatpush.msra.mxu0 0.0
        %585 = vmatpush.msra.mxu0 0.0
        %586 = vmatpush.msra.mxu0 0.0
        %587 = vmatpush.msra.mxu0 0.0
        %588 = vmatpush.msra.mxu0 0.0
        %589 = vmatpush.msra.mxu0 %v571
        %590 = vmatpush.msra.mxu0 %v570
        %591 = vmatpush.msra.mxu0 %v569
        %592 = vmatpush.msra.mxu0 %v568
        %593 = vmatmul.f32.gmra.mxu0 %v403
        %v594 = vpop.f32.mrf.mxu0
        %v595 = vadd.f32 %v575, %v594
        %596 = vdwg.mxu0
        %s597 = scalar_lea.vmem %s3, 160
        %v598 = vld [vmem:[%s597] sm:$0xff]
        %v599 = vld [vmem:[%s597 + $0x8] sm:$0xff]
        %v600 = vld [vmem:[%s597 + $0x10] sm:$0xff]
        %v601 = vld [vmem:[%s597 + $0x18] sm:$0xff]
        %s602 = scalar_lea.vmem %s4, 5
        %v603 = vld [vmem:[%s602] sm:$0x1]
        %v605 = vperm.slane %v603, 0
        %607 = vmatpush.msra.mxu0 0.0
        %608 = vmatpush.msra.mxu0 0.0
        %609 = vmatpush.msra.mxu0 0.0
        %610 = vmatpush.msra.mxu0 0.0
        %611 = vmatpush.msra.mxu0 0.0
        %612 = vmatpush.msra.mxu0 0.0
        %613 = vmatpush.msra.mxu0 0.0
        %614 = vmatpush.msra.mxu0 0.0
        %615 = vmatpush.msra.mxu0 0.0
        %616 = vmatpush.msra.mxu0 0.0
        %617 = vmatpush.msra.mxu0 0.0
        %618 = vmatpush.msra.mxu0 0.0
        %619 = vmatpush.msra.mxu0 %v601
        %620 = vmatpush.msra.mxu0 %v600
        %621 = vmatpush.msra.mxu0 %v599
        %622 = vmatpush.msra.mxu0 %v598
        %623 = vmatmul.f32.gmra.mxu0 %v436
        %v624 = vpop.f32.mrf.mxu0
        %v625 = vadd.f32 %v605, %v624
        %626 = vdwg.mxu0
        %s627 = scalar_lea.vmem %s3, 288
        %v628 = vld [vmem:[%s627] sm:$0xff]
        %v629 = vld [vmem:[%s627 + $0x8] sm:$0xff]
        %v630 = vld [vmem:[%s627 + $0x10] sm:$0xff]
        %v631 = vld [vmem:[%s627 + $0x18] sm:$0xff]
        %s632 = scalar_lea.vmem %s4, 9
        %v633 = vld [vmem:[%s632] sm:$0x1]
        %v635 = vperm.slane %v633, 0
        %637 = vmatpush.msra.mxu0 0.0
        %638 = vmatpush.msra.mxu0 0.0
        %639 = vmatpush.msra.mxu0 0.0
        %640 = vmatpush.msra.mxu0 0.0
        %641 = vmatpush.msra.mxu0 0.0
        %642 = vmatpush.msra.mxu0 0.0
        %643 = vmatpush.msra.mxu0 0.0
        %644 = vmatpush.msra.mxu0 0.0
        %645 = vmatpush.msra.mxu0 0.0
        %646 = vmatpush.msra.mxu0 0.0
        %647 = vmatpush.msra.mxu0 0.0
        %648 = vmatpush.msra.mxu0 0.0
        %649 = vmatpush.msra.mxu0 %v631
        %650 = vmatpush.msra.mxu0 %v630
        %651 = vmatpush.msra.mxu0 %v629
        %652 = vmatpush.msra.mxu0 %v628
        %653 = vmatmul.f32.gmra.mxu0 %v469
        %v654 = vpop.f32.mrf.mxu0
        %v655 = vadd.f32 %v635, %v654
        %656 = vdwg.mxu0
        %v658 = vsel %vm491, %v595, 0
        %v661 = vsel %vm491, %v625, 0
        %663 = vmatpush.xpose.msra.mxu0 0.0
        %664 = vmatpush.xpose.msra.mxu0 0.0
        %665 = vmatpush.xpose.msra.mxu0 0.0
        %666 = vmatpush.xpose.msra.mxu0 0.0
        %667 = vmatpush.xpose.msra.mxu0 0.0
        %668 = vmatpush.xpose.msra.mxu0 0.0
        %669 = vmatpush.xpose.msra.mxu0 0.0
        %670 = vmatpush.xpose.msra.mxu0 0.0
        %671 = vmatpush.xpose.msra.mxu0 0.0
        %672 = vmatpush.xpose.msra.mxu0 0.0
        %673 = vmatpush.xpose.msra.mxu0 0.0
        %674 = vmatpush.xpose.msra.mxu0 0.0
        %675 = vmatpush.xpose.msra.mxu0 0.0
        %676 = vmatpush.xpose.msra.mxu0 0.0
        %677 = vmatpush.xpose.msra.mxu0 0.0
        %678 = vmatpush.xpose.msra.mxu0 %v661
        %679 = vmatmul.f32.gmra.mxu0 %v658
        %v680 = vpop.f32.mrf.mxu0
        %v681 = vadd.f32 0.0, %v680
        %682 = vdwg.mxu0
        %v683 = vmul.f32 %v681, 0.35355338
        %v684 = vsel %vm491, %v683, -inf
        %685 = vmax.xlane.f32.xlu0 %v684
        %v686 = vpop.xlane.xlu0 %685
        %v687 = vsub.f32 %v683, %v686
        %v688 = vmul.f32 %v687, 1.442695
        %v689 = vpow.pop %v688
        %v690 = vsel %vm491, %v689, 0.0
        %691 = vadd.xlane.f32.xlu0 %v690
        %v692 = vpop.xlane.xlu0 %691
        %v693 = vrcp.pop %v692
        %v694 = vmul.f32 %v692, %v693
        %v695 = vsub.f32 1.0, %v694
        %v696 = vmul.f32 %v693, %v695
        %v697 = vadd.f32 %v693, %v696
        %vm698 = vweird.f32 %v692
        %vm699 = vweird.f32 %v693
        %vm700 = vmor %vm698, %vm699
        %v701 = vsel %vm700, %v693, %v697
        %v702 = vand.u32 2147483647, %v692
        %vm703 = vcmp.eq.f32.partialorder %v702, 8.507059e+37
        %v704 = vand.u32 %v692, 2147483648
        %v705 = vor.u32 1.1754944e-38, %v704
        %v706 = vsel %vm703, %v705, %v701
        %v707 = vmul.f32 %v689, %v706
        %v709 = vsel %vm491, %v707, 0
        %711 = vmatpush.msra.mxu0 0.0
        %712 = vmatpush.msra.mxu0 0.0
        %713 = vmatpush.msra.mxu0 0.0
        %714 = vmatpush.msra.mxu0 0.0
        %715 = vmatpush.msra.mxu0 0.0
        %716 = vmatpush.msra.mxu0 0.0
        %717 = vmatpush.msra.mxu0 0.0
        %718 = vmatpush.msra.mxu0 0.0
        %719 = vmatpush.msra.mxu0 0.0
        %720 = vmatpush.msra.mxu0 0.0
        %721 = vmatpush.msra.mxu0 0.0
        %722 = vmatpush.msra.mxu0 0.0
        %723 = vmatpush.msra.mxu0 0.0
        %724 = vmatpush.msra.mxu0 0.0
        %725 = vmatpush.msra.mxu0 0.0
        %726 = vmatpush.msra.mxu0 %v655
        %727 = vmatmul.f32.gmra.mxu0 %v709
        %v728 = vpop.f32.mrf.mxu0
        %v729 = vadd.f32 0.0, %v728
        %730 = vdwg.mxu0
        %s731 = scalar_lea.vmem %s5, 8
        %v732 = vld [vmem:[%s731] sm:$0xff]
        %v734 = vsel %vm491, %v729, 0
        %736 = vmatpush.msra.mxu0 0.0
        %737 = vmatpush.msra.mxu0 0.0
        %738 = vmatpush.msra.mxu0 0.0
        %739 = vmatpush.msra.mxu0 0.0
        %740 = vmatpush.msra.mxu0 0.0
        %741 = vmatpush.msra.mxu0 0.0
        %742 = vmatpush.msra.mxu0 0.0
        %743 = vmatpush.msra.mxu0 0.0
        %744 = vmatpush.msra.mxu0 0.0
        %745 = vmatpush.msra.mxu0 0.0
        %746 = vmatpush.msra.mxu0 0.0
        %747 = vmatpush.msra.mxu0 0.0
        %748 = vmatpush.msra.mxu0 0.0
        %749 = vmatpush.msra.mxu0 0.0
        %750 = vmatpush.msra.mxu0 0.0
        %751 = vmatpush.msra.mxu0 %v732
        %752 = vmatmul.f32.gmra.mxu0 %v734
        %v753 = vpop.f32.mrf.mxu0
        %v754 = vadd.f32 0.0, %v753
        %755 = vdwg.mxu0
        %v757 = vsel %vm491, %v564, 0
        %759 = vmatpush.msra.mxu0 0.0
        %760 = vmatpush.msra.mxu0 0.0
        %761 = vmatpush.msra.mxu0 0.0
        %762 = vmatpush.msra.mxu0 0.0
        %763 = vmatpush.msra.mxu0 0.0
        %764 = vmatpush.msra.mxu0 0.0
        %765 = vmatpush.msra.mxu0 0.0
        %766 = vmatpush.msra.mxu0 0.0
        %767 = vmatpush.msra.mxu0 0.0
        %768 = vmatpush.msra.mxu0 0.0
        %769 = vmatpush.msra.mxu0 0.0
        %770 = vmatpush.msra.mxu0 0.0
        %771 = vmatpush.msra.mxu0 0.0
        %772 = vmatpush.msra.mxu0 0.0
        %773 = vmatpush.msra.mxu0 0.0
        %774 = vmatpush.msra.mxu0 %v566
        %775 = vmatmul.f32.gmra.mxu0 %v757
        %v776 = vpop.f32.mrf.mxu0
        %v777 = vadd.f32 %v754, %v776
        %778 = vdwg.mxu0
        %s779 = scalar_lea.vmem %s3, 64
        %v780 = vld [vmem:[%s779] sm:$0xff]
        %v781 = vld [vmem:[%s779 + $0x8] sm:$0xff]
        %v782 = vld [vmem:[%s779 + $0x10] sm:$0xff]
        %v783 = vld [vmem:[%s779 + $0x18] sm:$0xff]
        %s784 = scalar_lea.vmem %s4, 2
        %v785 = vld [vmem:[%s784] sm:$0x1]
        %v787 = vperm.slane %v785, 0
        %789 = vmatpush.msra.mxu0 0.0
        %790 = vmatpush.msra.mxu0 0.0
        %791 = vmatpush.msra.mxu0 0.0
        %792 = vmatpush.msra.mxu0 0.0
        %793 = vmatpush.msra.mxu0 0.0
        %794 = vmatpush.msra.mxu0 0.0
        %795 = vmatpush.msra.mxu0 0.0
        %796 = vmatpush.msra.mxu0 0.0
        %797 = vmatpush.msra.mxu0 0.0
        %798 = vmatpush.msra.mxu0 0.0
        %799 = vmatpush.msra.mxu0 0.0
        %800 = vmatpush.msra.mxu0 0.0
        %801 = vmatpush.msra.mxu0 %v783
        %802 = vmatpush.msra.mxu0 %v782
        %803 = vmatpush.msra.mxu0 %v781
        %804 = vmatpush.msra.mxu0 %v780
        %805 = vmatmul.f32.gmra.mxu0 %v403
        %v806 = vpop.f32.mrf.mxu0
        %v807 = vadd.f32 %v787, %v806
        %808 = vdwg.mxu0
        %s809 = scalar_lea.vmem %s3, 192
        %v810 = vld [vmem:[%s809] sm:$0xff]
        %v811 = vld [vmem:[%s809 + $0x8] sm:$0xff]
        %v812 = vld [vmem:[%s809 + $0x10] sm:$0xff]
        %v813 = vld [vmem:[%s809 + $0x18] sm:$0xff]
        %s814 = scalar_lea.vmem %s4, 6
        %v815 = vld [vmem:[%s814] sm:$0x1]
        %v817 = vperm.slane %v815, 0
        %819 = vmatpush.msra.mxu0 0.0
        %820 = vmatpush.msra.mxu0 0.0
        %821 = vmatpush.msra.mxu0 0.0
        %822 = vmatpush.msra.mxu0 0.0
        %823 = vmatpush.msra.mxu0 0.0
        %824 = vmatpush.msra.mxu0 0.0
        %825 = vmatpush.msra.mxu0 0.0
        %826 = vmatpush.msra.mxu0 0.0
        %827 = vmatpush.msra.mxu0 0.0
        %828 = vmatpush.msra.mxu0 0.0
        %829 = vmatpush.msra.mxu0 0.0
        %830 = vmatpush.msra.mxu0 0.0
        %831 = vmatpush.msra.mxu0 %v813
        %832 = vmatpush.msra.mxu0 %v812
        %833 = vmatpush.msra.mxu0 %v811
        %834 = vmatpush.msra.mxu0 %v810
        %835 = vmatmul.f32.gmra.mxu0 %v436
        %v836 = vpop.f32.mrf.mxu0
        %v837 = vadd.f32 %v817, %v836
        %838 = vdwg.mxu0
        %s839 = scalar_lea.vmem %s3, 320
        %v840 = vld [vmem:[%s839] sm:$0xff]
        %v841 = vld [vmem:[%s839 + $0x8] sm:$0xff]
        %v842 = vld [vmem:[%s839 + $0x10] sm:$0xff]
        %v843 = vld [vmem:[%s839 + $0x18] sm:$0xff]
        %s844 = scalar_lea.vmem %s4, 10
        %v845 = vld [vmem:[%s844] sm:$0x1]
        %v847 = vperm.slane %v845, 0
        %849 = vmatpush.msra.mxu0 0.0
        %850 = vmatpush.msra.mxu0 0.0
        %851 = vmatpush.msra.mxu0 0.0
        %852 = vmatpush.msra.mxu0 0.0
        %853 = vmatpush.msra.mxu0 0.0
        %854 = vmatpush.msra.mxu0 0.0
        %855 = vmatpush.msra.mxu0 0.0
        %856 = vmatpush.msra.mxu0 0.0
        %857 = vmatpush.msra.mxu0 0.0
        %858 = vmatpush.msra.mxu0 0.0
        %859 = vmatpush.msra.mxu0 0.0
        %860 = vmatpush.msra.mxu0 0.0
        %861 = vmatpush.msra.mxu0 %v843
        %862 = vmatpush.msra.mxu0 %v842
        %863 = vmatpush.msra.mxu0 %v841
        %864 = vmatpush.msra.mxu0 %v840
        %865 = vmatmul.f32.gmra.mxu0 %v469
        %v866 = vpop.f32.mrf.mxu0
        %v867 = vadd.f32 %v847, %v866
        %868 = vdwg.mxu0
        %v870 = vsel %vm491, %v807, 0
        %v873 = vsel %vm491, %v837, 0
        %875 = vmatpush.xpose.msra.mxu0 0.0
        %876 = vmatpush.xpose.msra.mxu0 0.0
        %877 = vmatpush.xpose.msra.mxu0 0.0
        %878 = vmatpush.xpose.msra.mxu0 0.0
        %879 = vmatpush.xpose.msra.mxu0 0.0
        %880 = vmatpush.xpose.msra.mxu0 0.0
        %881 = vmatpush.xpose.msra.mxu0 0.0
        %882 = vmatpush.xpose.msra.mxu0 0.0
        %883 = vmatpush.xpose.msra.mxu0 0.0
        %884 = vmatpush.xpose.msra.mxu0 0.0
        %885 = vmatpush.xpose.msra.mxu0 0.0
        %886 = vmatpush.xpose.msra.mxu0 0.0
        %887 = vmatpush.xpose.msra.mxu0 0.0
        %888 = vmatpush.xpose.msra.mxu0 0.0
        %889 = vmatpush.xpose.msra.mxu0 0.0
        %890 = vmatpush.xpose.msra.mxu0 %v873
        %891 = vmatmul.f32.gmra.mxu0 %v870
        %v892 = vpop.f32.mrf.mxu0
        %v893 = vadd.f32 0.0, %v892
        %894 = vdwg.mxu0
        %v895 = vmul.f32 %v893, 0.35355338
        %v896 = vsel %vm491, %v895, -inf
        %897 = vmax.xlane.f32.xlu0 %v896
        %v898 = vpop.xlane.xlu0 %897
        %v899 = vsub.f32 %v895, %v898
        %v900 = vmul.f32 %v899, 1.442695
        %v901 = vpow.pop %v900
        %v902 = vsel %vm491, %v901, 0.0
        %903 = vadd.xlane.f32.xlu0 %v902
        %v904 = vpop.xlane.xlu0 %903
        %v905 = vrcp.pop %v904
        %v906 = vmul.f32 %v904, %v905
        %v907 = vsub.f32 1.0, %v906
        %v908 = vmul.f32 %v905, %v907
        %v909 = vadd.f32 %v905, %v908
        %vm910 = vweird.f32 %v904
        %vm911 = vweird.f32 %v905
        %vm912 = vmor %vm910, %vm911
        %v913 = vsel %vm912, %v905, %v909
        %v914 = vand.u32 2147483647, %v904
        %vm915 = vcmp.eq.f32.partialorder %v914, 8.507059e+37
        %v916 = vand.u32 %v904, 2147483648
        %v917 = vor.u32 1.1754944e-38, %v916
        %v918 = vsel %vm915, %v917, %v913
        %v919 = vmul.f32 %v901, %v918
        %v921 = vsel %vm491, %v919, 0
        %923 = vmatpush.msra.mxu0 0.0
        %924 = vmatpush.msra.mxu0 0.0
        %925 = vmatpush.msra.mxu0 0.0
        %926 = vmatpush.msra.mxu0 0.0
        %927 = vmatpush.msra.mxu0 0.0
        %928 = vmatpush.msra.mxu0 0.0
        %929 = vmatpush.msra.mxu0 0.0
        %930 = vmatpush.msra.mxu0 0.0
        %931 = vmatpush.msra.mxu0 0.0
        %932 = vmatpush.msra.mxu0 0.0
        %933 = vmatpush.msra.mxu0 0.0
        %934 = vmatpush.msra.mxu0 0.0
        %935 = vmatpush.msra.mxu0 0.0
        %936 = vmatpush.msra.mxu0 0.0
        %937 = vmatpush.msra.mxu0 0.0
        %938 = vmatpush.msra.mxu0 %v867
        %939 = vmatmul.f32.gmra.mxu0 %v921
        %v940 = vpop.f32.mrf.mxu0
        %v941 = vadd.f32 0.0, %v940
        %942 = vdwg.mxu0
        %s943 = scalar_lea.vmem %s5, 16
        %v944 = vld [vmem:[%s943] sm:$0xff]
        %v946 = vsel %vm491, %v941, 0
        %948 = vmatpush.msra.mxu0 0.0
        %949 = vmatpush.msra.mxu0 0.0
        %950 = vmatpush.msra.mxu0 0.0
        %951 = vmatpush.msra.mxu0 0.0
        %952 = vmatpush.msra.mxu0 0.0
        %953 = vmatpush.msra.mxu0 0.0
        %954 = vmatpush.msra.mxu0 0.0
        %955 = vmatpush.msra.mxu0 0.0
        %956 = vmatpush.msra.mxu0 0.0
        %957 = vmatpush.msra.mxu0 0.0
        %958 = vmatpush.msra.mxu0 0.0
        %959 = vmatpush.msra.mxu0 0.0
        %960 = vmatpush.msra.mxu0 0.0
        %961 = vmatpush.msra.mxu0 0.0
        %962 = vmatpush.msra.mxu0 0.0
        %963 = vmatpush.msra.mxu0 %v944
        %964 = vmatmul.f32.gmra.mxu0 %v946
        %v965 = vpop.f32.mrf.mxu0
        %v966 = vadd.f32 0.0, %v965
        %967 = vdwg.mxu0
        %v968 = vadd.f32 %v777, %v966
        %s969 = scalar_lea.vmem %s3, 96
        %v970 = vld [vmem:[%s969] sm:$0xff]
        %v971 = vld [vmem:[%s969 + $0x8] sm:$0xff]
        %v972 = vld [vmem:[%s969 + $0x10] sm:$0xff]
        %v973 = vld [vmem:[%s969 + $0x18] sm:$0xff]
        %s974 = scalar_lea.vmem %s4, 3
        %v975 = vld [vmem:[%s974] sm:$0x1]
        %v977 = vperm.slane %v975, 0
        %979 = vmatpush.msra.mxu0 0.0
        %980 = vmatpush.msra.mxu0 0.0
        %981 = vmatpush.msra.mxu0 0.0
        %982 = vmatpush.msra.mxu0 0.0
        %983 = vmatpush.msra.mxu0 0.0
        %984 = vmatpush.msra.mxu0 0.0
        %985 = vmatpush.msra.mxu0 0.0
        %986 = vmatpush.msra.mxu0 0.0
        %987 = vmatpush.msra.mxu0 0.0
        %988 = vmatpush.msra.mxu0 0.0
        %989 = vmatpush.msra.mxu0 0.0
        %990 = vmatpush.msra.mxu0 0.0
        %991 = vmatpush.msra.mxu0 %v973
        %992 = vmatpush.msra.mxu0 %v972
        %993 = vmatpush.msra.mxu0 %v971
        %994 = vmatpush.msra.mxu0 %v970
        %995 = vmatmul.f32.gmra.mxu0 %v403
        %v996 = vpop.f32.mrf.mxu0
        %v997 = vadd.f32 %v977, %v996
        %998 = vdwg.mxu0
        %s999 = scalar_lea.vmem %s3, 224
        %v1000 = vld [vmem:[%s999] sm:$0xff]
        %v1001 = vld [vmem:[%s999 + $0x8] sm:$0xff]
        %v1002 = vld [vmem:[%s999 + $0x10] sm:$0xff]
        %v1003 = vld [vmem:[%s999 + $0x18] sm:$0xff]
        %s1004 = scalar_lea.vmem %s4, 7
        %v1005 = vld [vmem:[%s1004] sm:$0x1]
        %v1007 = vperm.slane %v1005, 0
        %1009 = vmatpush.msra.mxu0 0.0
        %1010 = vmatpush.msra.mxu0 0.0
        %1011 = vmatpush.msra.mxu0 0.0
        %1012 = vmatpush.msra.mxu0 0.0
        %1013 = vmatpush.msra.mxu0 0.0
        %1014 = vmatpush.msra.mxu0 0.0
        %1015 = vmatpush.msra.mxu0 0.0
        %1016 = vmatpush.msra.mxu0 0.0
        %1017 = vmatpush.msra.mxu0 0.0
        %1018 = vmatpush.msra.mxu0 0.0
        %1019 = vmatpush.msra.mxu0 0.0
        %1020 = vmatpush.msra.mxu0 0.0
        %1021 = vmatpush.msra.mxu0 %v1003
        %1022 = vmatpush.msra.mxu0 %v1002
        %1023 = vmatpush.msra.mxu0 %v1001
        %1024 = vmatpush.msra.mxu0 %v1000
        %1025 = vmatmul.f32.gmra.mxu0 %v436
        %v1026 = vpop.f32.mrf.mxu0
        %v1027 = vadd.f32 %v1007, %v1026
        %1028 = vdwg.mxu0
        %s1029 = scalar_lea.vmem %s3, 352
        %v1030 = vld [vmem:[%s1029] sm:$0xff]
        %v1031 = vld [vmem:[%s1029 + $0x8] sm:$0xff]
        %v1032 = vld [vmem:[%s1029 + $0x10] sm:$0xff]
        %v1033 = vld [vmem:[%s1029 + $0x18] sm:$0xff]
        %s1034 = scalar_lea.vmem %s4, 11
        %v1035 = vld [vmem:[%s1034] sm:$0x1]
        %v1037 = vperm.slane %v1035, 0
        %1039 = vmatpush.msra.mxu0 0.0
        %1040 = vmatpush.msra.mxu0 0.0
        %1041 = vmatpush.msra.mxu0 0.0
        %1042 = vmatpush.msra.mxu0 0.0
        %1043 = vmatpush.msra.mxu0 0.0
        %1044 = vmatpush.msra.mxu0 0.0
        %1045 = vmatpush.msra.mxu0 0.0
        %1046 = vmatpush.msra.mxu0 0.0
        %1047 = vmatpush.msra.mxu0 0.0
        %1048 = vmatpush.msra.mxu0 0.0
        %1049 = vmatpush.msra.mxu0 0.0
        %1050 = vmatpush.msra.mxu0 0.0
        %1051 = vmatpush.msra.mxu0 %v1033
        %1052 = vmatpush.msra.mxu0 %v1032
        %1053 = vmatpush.msra.mxu0 %v1031
        %1054 = vmatpush.msra.mxu0 %v1030
        %1055 = vmatmul.f32.gmra.mxu0 %v469
        %v1056 = vpop.f32.mrf.mxu0
        %v1057 = vadd.f32 %v1037, %v1056
        %1058 = vdwg.mxu0
        %v1060 = vsel %vm491, %v997, 0
        %v1063 = vsel %vm491, %v1027, 0
        %1065 = vmatpush.xpose.msra.mxu0 0.0
        %1066 = vmatpush.xpose.msra.mxu0 0.0
        %1067 = vmatpush.xpose.msra.mxu0 0.0
        %1068 = vmatpush.xpose.msra.mxu0 0.0
        %1069 = vmatpush.xpose.msra.mxu0 0.0
        %1070 = vmatpush.xpose.msra.mxu0 0.0
        %1071 = vmatpush.xpose.msra.mxu0 0.0
        %1072 = vmatpush.xpose.msra.mxu0 0.0
        %1073 = vmatpush.xpose.msra.mxu0 0.0
        %1074 = vmatpush.xpose.msra.mxu0 0.0
        %1075 = vmatpush.xpose.msra.mxu0 0.0
        %1076 = vmatpush.xpose.msra.mxu0 0.0
        %1077 = vmatpush.xpose.msra.mxu0 0.0
        %1078 = vmatpush.xpose.msra.mxu0 0.0
        %1079 = vmatpush.xpose.msra.mxu0 0.0
        %1080 = vmatpush.xpose.msra.mxu0 %v1063
        %1081 = vmatmul.f32.gmra.mxu0 %v1060
        %v1082 = vpop.f32.mrf.mxu0
        %v1083 = vadd.f32 0.0, %v1082
        %1084 = vdwg.mxu0
        %v1085 = vmul.f32 %v1083, 0.35355338
        %v1086 = vsel %vm491, %v1085, -inf
        %1087 = vmax.xlane.f32.xlu0 %v1086
        %v1088 = vpop.xlane.xlu0 %1087
        %v1089 = vsub.f32 %v1085, %v1088
        %v1090 = vmul.f32 %v1089, 1.442695
        %v1091 = vpow.pop %v1090
        %v1092 = vsel %vm491, %v1091, 0.0
        %1093 = vadd.xlane.f32.xlu0 %v1092
        %v1094 = vpop.xlane.xlu0 %1093
        %v1095 = vrcp.pop %v1094
        %v1096 = vmul.f32 %v1094, %v1095
        %v1097 = vsub.f32 1.0, %v1096
        %v1098 = vmul.f32 %v1095, %v1097
        %v1099 = vadd.f32 %v1095, %v1098
        %vm1100 = vweird.f32 %v1094
        %vm1101 = vweird.f32 %v1095
        %vm1102 = vmor %vm1100, %vm1101
        %v1103 = vsel %vm1102, %v1095, %v1099
        %v1104 = vand.u32 2147483647, %v1094
        %vm1105 = vcmp.eq.f32.partialorder %v1104, 8.507059e+37
        %v1106 = vand.u32 %v1094, 2147483648
        %v1107 = vor.u32 1.1754944e-38, %v1106
        %v1108 = vsel %vm1105, %v1107, %v1103
        %v1109 = vmul.f32 %v1091, %v1108
        %v1111 = vsel %vm491, %v1109, 0
        %1113 = vmatpush.msra.mxu0 0.0
        %1114 = vmatpush.msra.mxu0 0.0
        %1115 = vmatpush.msra.mxu0 0.0
        %1116 = vmatpush.msra.mxu0 0.0
        %1117 = vmatpush.msra.mxu0 0.0
        %1118 = vmatpush.msra.mxu0 0.0
        %1119 = vmatpush.msra.mxu0 0.0
        %1120 = vmatpush.msra.mxu0 0.0
        %1121 = vmatpush.msra.mxu0 0.0
        %1122 = vmatpush.msra.mxu0 0.0
        %1123 = vmatpush.msra.mxu0 0.0
        %1124 = vmatpush.msra.mxu0 0.0
        %1125 = vmatpush.msra.mxu0 0.0
        %1126 = vmatpush.msra.mxu0 0.0
        %1127 = vmatpush.msra.mxu0 0.0
        %1128 = vmatpush.msra.mxu0 %v1057
        %1129 = vmatmul.f32.gmra.mxu0 %v1111
        %v1130 = vpop.f32.mrf.mxu0
        %v1131 = vadd.f32 0.0, %v1130
        %1132 = vdwg.mxu0
        %s1133 = scalar_lea.vmem %s5, 24
        %v1134 = vld [vmem:[%s1133] sm:$0xff]
        %v1136 = vsel %vm491, %v1131, 0
        %1138 = vmatpush.msra.mxu0 0.0
        %1139 = vmatpush.msra.mxu0 0.0
        %1140 = vmatpush.msra.mxu0 0.0
        %1141 = vmatpush.msra.mxu0 0.0
        %1142 = vmatpush.msra.mxu0 0.0
        %1143 = vmatpush.msra.mxu0 0.0
        %1144 = vmatpush.msra.mxu0 0.0
        %1145 = vmatpush.msra.mxu0 0.0
        %1146 = vmatpush.msra.mxu0 0.0
        %1147 = vmatpush.msra.mxu0 0.0
        %1148 = vmatpush.msra.mxu0 0.0
        %1149 = vmatpush.msra.mxu0 0.0
        %1150 = vmatpush.msra.mxu0 0.0
        %1151 = vmatpush.msra.mxu0 0.0
        %1152 = vmatpush.msra.mxu0 0.0
        %1153 = vmatpush.msra.mxu0 %v1134
        %1154 = vmatmul.f32.gmra.mxu0 %v1136
        %v1155 = vpop.f32.mrf.mxu0
        %v1156 = vadd.f32 0.0, %v1155
        %1157 = vdwg.mxu0
        %v1158 = vadd.f32 %v968, %v1156
        %v1159 = vperm.slane %v392, 0
        %v1160 = vadd.f32 %v1158, %v1159
        %v1161 = vadd.f32 %v389, %v1160
        %v1162 = vmul.f32 %v1161, %v1161
        %v1163 = vsel %vm401, %v1162, 0.0
        %1164 = vadd.xlane.f32.xlu0 %v1163
        %v1165 = vpop.xlane.xlu0 %1164
        %v1166 = vrsqrt.pop %v1165
        %v1167 = vmul.f32 %v1166, %v1165
        %v1168 = vmul.f32 %v1167, %v1166
        %v1169 = vmul.f32 0.5, %v1168
        %v1170 = vsub.f32 1.5, %v1169
        %v1171 = vmul.f32 %v1166, %v1170
        %v1172 = vmul.f32 %v1165, %v1171
        %vm1173 = vcmp.eq.f32.partialorder %v1165, inf
        %v1174 = vsel %vm1173, %v1165, %v1172
        %vm1175 = vcmp.eq.f32.partialorder %v1165, 0.0
        %v1176 = vand.u32 %v1165, 2147483648
        %v1177 = vsel %vm1175, %v1176, %v1174
        %v1178 = vmul.f32 %v1177, 0.17677669
        %v1179 = vperm.slane %v392, 2
        %v1180 = vmul.f32 %v1179, %v1161
        %v1181 = vadd.f32 %v1178, 1e-08
        %v1182 = vrcp.pop %v1181
        %v1183 = vmul.f32 %v1181, %v1182
        %v1184 = vsub.f32 1.0, %v1183
        %v1185 = vmul.f32 %v1182, %v1184
        %v1186 = vadd.f32 %v1182, %v1185
        %vm1187 = vweird.f32 %v1181
        %vm1188 = vweird.f32 %v1182
        %vm1189 = vmor %vm1187, %vm1188
        %v1190 = vsel %vm1189, %v1182, %v1186
        %v1191 = vand.u32 2147483647, %v1181
        %vm1192 = vcmp.eq.f32.partialorder %v1191, 8.507059e+37
        %v1193 = vand.u32 %v1181, 2147483648
        %v1194 = vor.u32 1.1754944e-38, %v1193
        %v1195 = vsel %vm1192, %v1194, %v1190
        %v1196 = vmul.f32 %v1180, %v1195
        %v1197 = vld [vmem:[%s7] sm:$0xff]
        %v1198 = vld [vmem:[%s7 + $0x8] sm:$0xff]
        %v1199 = vld [vmem:[%s7 + $0x10] sm:$0xff]
        %v1200 = vld [vmem:[%s7 + $0x18] sm:$0xff]
        %v1201 = vld [vmem:[%s8] sm:$0x1]
        %v1203 = vperm.slane %v1201, 0
        %v1206 = vsel %vm401, %v1196, 0
        %1208 = vmatpush.msra.mxu0 0.0
        %1209 = vmatpush.msra.mxu0 0.0
        %1210 = vmatpush.msra.mxu0 0.0
        %1211 = vmatpush.msra.mxu0 0.0
        %1212 = vmatpush.msra.mxu0 0.0
        %1213 = vmatpush.msra.mxu0 0.0
        %1214 = vmatpush.msra.mxu0 0.0
        %1215 = vmatpush.msra.mxu0 0.0
        %1216 = vmatpush.msra.mxu0 0.0
        %1217 = vmatpush.msra.mxu0 0.0
        %1218 = vmatpush.msra.mxu0 0.0
        %1219 = vmatpush.msra.mxu0 0.0
        %1220 = vmatpush.msra.mxu0 %v1200
        %1221 = vmatpush.msra.mxu0 %v1199
        %1222 = vmatpush.msra.mxu0 %v1198
        %1223 = vmatpush.msra.mxu0 %v1197
        %1224 = vmatmul.f32.gmra.mxu0 %v1206
        %v1225 = vpop.f32.mrf.mxu0
        %v1226 = vadd.f32 %v1203, %v1225
        %1227 = vdwg.mxu0
        %v1228 = vmul.f32 %v1226, 0.5
        %v1229 = vmul.f32 %v1226, 0.70710677
        %v1230 = vmul.f32 %v1229, %v1229
        %v1231 = vmin.f32 16.0, %v1230
        %v1232 = vmul.f32 %v1231, 2.1237322e-06
        %v1233 = vadd.f32 %v1232, 0.00028619796
        %v1234 = vmul.f32 %v1231, %v1233
        %v1235 = vadd.f32 %v1234, 0.0036580483
        %v1236 = vmul.f32 %v1231, %v1235
        %v1237 = vadd.f32 %v1236, 0.05243302
        %v1238 = vmul.f32 %v1231, %v1237
        %v1239 = vadd.f32 %v1238, 0.18741608
        %v1240 = vmul.f32 %v1231, %v1239
        %v1241 = vadd.f32 %v1240, 1.1283791
        %v1242 = vmul.f32 %v1229, %v1241
        %v1243 = vmul.f32 %v1231, 3.8918573e-05
        %v1244 = vadd.f32 %v1243, 0.001143296
        %v1245 = vmul.f32 %v1231, %v1244
        %v1246 = vadd.f32 %v1245, 0.014752088
        %v1247 = vmul.f32 %v1231, %v1246
        %v1248 = vadd.f32 %v1247, 0.112945676
        %v1249 = vmul.f32 %v1231, %v1248
        %v1250 = vadd.f32 %v1249, 0.4994258
        %v1251 = vmul.f32 %v1231, %v1250
        %v1252 = vadd.f32 %v1251, 1.0
        %v1253 = vrcp.pop %v1252
        %v1254 = vmul.f32 %v1252, %v1253
        %v1255 = vsub.f32 1.0, %v1254
        %v1256 = vmul.f32 %v1253, %v1255
        %v1257 = vadd.f32 %v1253, %v1256
        %vm1258 = vweird.f32 %v1252
        %vm1259 = vweird.f32 %v1253
        %vm1260 = vmor %vm1258, %vm1259
        %v1261 = vsel %vm1260, %v1253, %v1257
        %v1262 = vand.u32 2147483647, %v1252
        %vm1263 = vcmp.eq.f32.partialorder %v1262, 8.507059e+37
        %v1264 = vand.u32 %v1252, 2147483648
        %v1265 = vor.u32 1.1754944e-38, %v1264
        %v1266 = vsel %vm1263, %v1265, %v1261
        %v1267 = vmul.f32 %v1242, %v1266
        %v1268 = vmin.f32 %v1267, 1.0
        %v1269 = vmax.f32 %v1268, -1.0
        %v1270 = vadd.f32 %v1269, 1.0
        %v1271 = vmul.f32 %v1228, %v1270
        %v1272 = vld [vmem:[%s9] sm:$0xff]
        %v1273 = vld [vmem:[%s9 + $0x8] sm:$0xff]
        %v1274 = vld [vmem:[%s9 + $0x10] sm:$0xff]
        %v1275 = vld [vmem:[%s9 + $0x18] sm:$0xff]
        %v1276 = vld [vmem:[%s9 + $0x20] sm:$0xff]
        %v1277 = vld [vmem:[%s9 + $0x28] sm:$0xff]
        %v1278 = vld [vmem:[%s9 + $0x30] sm:$0xff]
        %v1279 = vld [vmem:[%s9 + $0x38] sm:$0xff]
        %v1280 = vld [vmem:[%s9 + $0x40] sm:$0xff]
        %v1281 = vld [vmem:[%s9 + $0x48] sm:$0xff]
        %v1282 = vld [vmem:[%s9 + $0x50] sm:$0xff]
        %v1283 = vld [vmem:[%s9 + $0x58] sm:$0xff]
        %v1284 = vld [vmem:[%s9 + $0x60] sm:$0xff]
        %v1285 = vld [vmem:[%s9 + $0x68] sm:$0xff]
        %v1286 = vld [vmem:[%s9 + $0x70] sm:$0xff]
        %v1287 = vld [vmem:[%s9 + $0x78] sm:$0xff]
        %v1288 = vperm.slane %v392, 1
        %1289 = vmatpush.msra.mxu0 %v1287
        %1290 = vmatpush.msra.mxu0 %v1286
        %1291 = vmatpush.msra.mxu0 %v1285
        %1292 = vmatpush.msra.mxu0 %v1284
        %1293 = vmatpush.msra.mxu0 %v1283
        %1294 = vmatpush.msra.mxu0 %v1282
        %1295 = vmatpush.msra.mxu0 %v1281
        %1296 = vmatpush.msra.mxu0 %v1280
        %1297 = vmatpush.msra.mxu0 %v1279
        %1298 = vmatpush.msra.mxu0 %v1278
        %1299 = vmatpush.msra.mxu0 %v1277
        %1300 = vmatpush.msra.mxu0 %v1276
        %1301 = vmatpush.msra.mxu0 %v1275
        %1302 = vmatpush.msra.mxu0 %v1274
        %1303 = vmatpush.msra.mxu0 %v1273
        %1304 = vmatpush.msra.mxu0 %v1272
        %1305 = vmatmul.f32.gmra.mxu0 %v1271
        %v1306 = vpop.f32.mrf.mxu0
        %v1307 = vadd.f32 %v1288, %v1306
        %1308 = vdwg.mxu0
        %v1309 = vadd.f32 %v1196, %v1307
        %v1310 = vmul.f32 %v1309, %v1309
        %v1311 = vsel %vm401, %v1310, 0.0
        %1312 = vadd.xlane.f32.xlu0 %v1311
        %v1313 = vpop.xlane.xlu0 %1312
        %v1314 = vrsqrt.pop %v1313
        %v1315 = vmul.f32 %v1314, %v1313
        %v1316 = vmul.f32 %v1315, %v1314
        %v1317 = vmul.f32 0.5, %v1316
        %v1318 = vsub.f32 1.5, %v1317
        %v1319 = vmul.f32 %v1314, %v1318
        %v1320 = vmul.f32 %v1313, %v1319
        %vm1321 = vcmp.eq.f32.partialorder %v1313, inf
        %v1322 = vsel %vm1321, %v1313, %v1320
        %vm1323 = vcmp.eq.f32.partialorder %v1313, 0.0
        %v1324 = vand.u32 %v1313, 2147483648
        %v1325 = vsel %vm1323, %v1324, %v1322
        %v1326 = vmul.f32 %v1325, 0.17677669
        %v1327 = vperm.slane %v392, 3
        %v1328 = vmul.f32 %v1327, %v1309
        %v1329 = vadd.f32 %v1326, 1e-08
        %v1330 = vrcp.pop %v1329
        %v1331 = vmul.f32 %v1329, %v1330
        %v1332 = vsub.f32 1.0, %v1331
        %v1333 = vmul.f32 %v1330, %v1332
        %v1334 = vadd.f32 %v1330, %v1333
        %vm1335 = vweird.f32 %v1329
        %vm1336 = vweird.f32 %v1330
        %vm1337 = vmor %vm1335, %vm1336
        %v1338 = vsel %vm1337, %v1330, %v1334
        %v1339 = vand.u32 2147483647, %v1329
        %vm1340 = vcmp.eq.f32.partialorder %v1339, 8.507059e+37
        %v1341 = vand.u32 %v1329, 2147483648
        %v1342 = vor.u32 1.1754944e-38, %v1341
        %v1343 = vsel %vm1340, %v1342, %v1338
        %v1344 = vmul.f32 %v1328, %v1343
        %1345 = vst.msk [vmem:[%s376] sm:$0xff] %vm401, %v1344
        %s1346 = sand.u32 %s257, 1
        %s1347 = scalar_lea.sflag [#allocation3], %s1346
        %s1348 = sand.u32 %s257, 1
        %s1349 = smul.addr %s1348, 8
        %s1350 = scalar_lea.vmem [#allocation2], %s1349
        // Predicated region
        $region61: #{tpu_custom_call.1} parent=59 // pred_check
          %p1351 = pneg %p267
        $region62: #{tpu_custom_call.1} parent=59 // pred_check_branch
          %1353 = sbr.rel (%p1351) target = $region64
        $region63: #{tpu_custom_call.1} parent=59 // pred_region
          %1355 = vsyncadd %s1347, 0
          %s1356 = smul.addr %s24, 8
          %s1357 = scalar_lea.hbm %s10, %s1356
          %s1359 = sshll.u32 %s1350, 4
          %s1360 = int_to_ptr.vmem [resolvable:$true] %s1359
          %s1361 = sshll.u32 %s1357, 4
          %s1362 = int_to_ptr.hbm [resolvable:$true] %s1361
          %1364 = dma.vmem_to_hbm [thread:$0]  %s1360, 128, %s1362, %s1347
        $region64: #{tpu_custom_call.1} parent=59 // pred_fallthru
          _
      $region60: #{tpu_custom_call.1} parent=5 // pred_fallthru
        _
      %p1365 = scmp.le.s32.totalorder 2, %s19
      // Predicated region
      $region65: #{tpu_custom_call.1} parent=5 // pred_check
        %p1366 = pneg %p1365
      $region66: #{tpu_custom_call.1} parent=5 // pred_check_branch
        %1368 = sbr.rel (%p1366) target = $region68
      $region67: #{tpu_custom_call.1} parent=5 // pred_region
        %s1369 = ssub.s32 %s19, 2
        // Predicated region
        $region69: #{tpu_custom_call.1} parent=67 // pred_check
          %p1370 = pneg %p273
        $region70: #{tpu_custom_call.1} parent=67 // pred_check_branch
          %1372 = sbr.rel (%p1370) target = $region72
        $region71: #{tpu_custom_call.1} parent=67 // pred_region
          %s1373 = sand.u32 %s258, 1
          %s1374 = scalar_lea.sflag [#allocation3], %s1373
          %s1375 = sand.u32 %s258, 1
          %s1376 = smul.addr %s1375, 8
          %s1377 = scalar_lea.vmem [#allocation2], %s1376
          %1379 = dma.done %s1374, 128
        $region72: #{tpu_custom_call.1} parent=67 // pred_fallthru
          _
      $region68: #{tpu_custom_call.1} parent=5 // pred_fallthru
        _
    $region6: #{tpu_custom_call.1} parent=1 // loop_footer
      %s23 = sadd.s32 1, %s19
    $region7: #{tpu_custom_call.1} parent=1 // loop_footer_branch
      %18 = sbr.rel target = $region3
    $region8: #{tpu_custom_call.1} parent=1 // loop_exit
      _
    %1380 = vsyncpa [#allocation3], 1
    %s1381 = scalar_lea.sflag [#allocation3], 1
    %1382 = vsyncpa %s1381, 1

</llo_original>
